<compile_context>
chip_gen: v5e
topology: v5e:2x2
jax: 0.10.0
libtpu: 0.0.40
codegen_flags: <defaults>
</compile_context>

<pallas_src>
import functools

import numpy as np
import jax
import jax.numpy as jnp
from jax import lax
from jax.experimental import pallas as pl
from jax.experimental.pallas import tpu as pltpu


def _round_up(n, m):
    return (n + m - 1) // m * m


# --------------------------------------------------------------------------- #
# Kernel
# --------------------------------------------------------------------------- #
def realnvp_fwd_kernel(xc_ref, w1_ref, b1_ref, w2_ref, b2_ref, w3_ref, b3_ref,
                       y_ref, ld_ref, *, layers, in_p):
    """All coupling blocks for one batch tile.

    xc : (TB, IN_P)  packed rows [x_even | x_odd | cond | 0]  (bf16 or f32)
    w1 : (L, IN_P, HP)   K-packed first Linear (xa rows + cond rows, xb rows = 0)
    b1 : (L, 1, HP)      f32
    w2 : (L, HP, HP)
    b2 : (L, 1, HP)      f32
    w3 : (L, HP, 2*IN_P) fused s|t head; s/t columns sit at the xb lanes of the
                         packed row, all other columns zero (=> exp(0)=1, +0)
    b3 : (L, 1, 2*IN_P)  f32, same lane placement as w3
    y  : (TB, IN_P)      updated packed rows (the module's y, still de-interleaved)
    ld : (TB, 8)         log_det broadcast across 8 lanes (cheap masked store)
    """
    cdt = w1_ref.dtype                     # matmul operand dtype (bf16/f32), static
    xc = xc_ref[...].astype(jnp.float32)   # carry stays f32 across layers
    ld = jnp.zeros((xc.shape[0], 1), jnp.float32)

    def couple(xc, ld, l):
        h = jnp.dot(xc.astype(cdt), w1_ref[l],
                    preferred_element_type=jnp.float32) + b1_ref[l]
        h = jnp.maximum(h, 0.0)
        h = jnp.dot(h.astype(cdt), w2_ref[l],
                    preferred_element_type=jnp.float32) + b2_ref[l]
        h = jnp.maximum(h, 0.0)
        st = jnp.dot(h.astype(cdt), w3_ref[l],
                     preferred_element_type=jnp.float32) + b3_ref[l]
        s = jnp.tanh(st[:, :in_p])         # zero outside the xb segment
        t = st[:, in_p:]                   # zero outside the xb segment
        xc = xc * jnp.exp(s) + t           # xa / cond / pad lanes: x*1 + 0 (exact)
        ld = ld + jnp.sum(s, axis=-1, keepdims=True)
        return xc, ld

    if layers <= 16:
        # Fully unrolled: static weight slices, cross-layer LLO scheduling.
        for l in range(layers):
            xc, ld = couple(xc, ld, l)
    else:
        # Bounded code size for deep stacks (parity already baked into weights).
        xc, ld = lax.fori_loop(0, layers,
                               lambda l, c: couple(c[0], c[1], l), (xc, ld))

    y_ref[...] = xc.astype(y_ref.dtype)
    ld_ref[...] = jnp.broadcast_to(ld, ld_ref.shape)


# --------------------------------------------------------------------------- #
# Parameter packing (done ONCE, not per call)
# --------------------------------------------------------------------------- #
def pack_params(params, *, weight_dtype=jnp.bfloat16):
    """Pack weights into the lane-packed carry layout; bf16 weights by default."""
    w1a = np.asarray(params["w1a"], np.float32)   # (L, half, hidden)
    w1c = np.asarray(params["w1c"], np.float32)   # (L, cond, hidden)
    w2 = np.asarray(params["w2"], np.float32)
    w3s = np.asarray(params["w3s"], np.float32)
    w3t = np.asarray(params["w3t"], np.float32)
    b1 = np.asarray(params["b1"], np.float32)
    b2 = np.asarray(params["b2"], np.float32)
    b3s = np.asarray(params["b3s"], np.float32)
    b3t = np.asarray(params["b3t"], np.float32)

    L, half, hidden = w1a.shape
    cond_dim = w1c.shape[1]
    IN_P = _round_up(2 * half + cond_dim, 128)
    HP = _round_up(hidden, 128)

    w1p = np.zeros((L, IN_P, HP), np.float32)
    w2p = np.zeros((L, HP, HP), np.float32)
    w3p = np.zeros((L, HP, 2 * IN_P), np.float32)
    b1p = np.zeros((L, 1, HP), np.float32)
    b2p = np.zeros((L, 1, HP), np.float32)
    b3p = np.zeros((L, 1, 2 * IN_P), np.float32)

    for l in range(L):
        a_off = 0 if l % 2 == 0 else half    # xa segment (even features on even layers)
        b_off = half if l % 2 == 0 else 0    # xb segment (where s/t land)
        w1p[l, a_off:a_off + half, :hidden] = w1a[l]
        w1p[l, 2 * half:2 * half + cond_dim, :hidden] = w1c[l]
        w2p[l, :hidden, :hidden] = w2[l]
        w3p[l, :hidden, b_off:b_off + half] = w3s[l]
        w3p[l, :hidden, IN_P + b_off:IN_P + b_off + half] = w3t[l]
        b1p[l, 0, :hidden] = b1[l, 0]
        b2p[l, 0, :hidden] = b2[l, 0]
        b3p[l, 0, b_off:b_off + half] = b3s[l, 0]
        b3p[l, 0, IN_P + b_off:IN_P + b_off + half] = b3t[l, 0]

    return {
        "w1": jnp.asarray(w1p, weight_dtype),
        "b1": jnp.asarray(b1p, jnp.float32),
        "w2": jnp.asarray(w2p, weight_dtype),
        "b2": jnp.asarray(b2p, jnp.float32),
        "w3": jnp.asarray(w3p, weight_dtype),
        "b3": jnp.asarray(b3p, jnp.float32),
    }


# --------------------------------------------------------------------------- #
# Wrapper
# --------------------------------------------------------------------------- #
def realnvp_forward(x, cond, packed, layers, *, block_batch=512):
    """Pallas-backed RealNVP.forward. Returns (y, log_det) like the nn.Module."""
    B, dim = x.shape
    assert dim % 2 == 0, "kernel assumes even dim (alternating mask halves equal)"
    half = dim // 2
    cond_dim = cond.shape[1]
    L, IN_P, HP = packed["w1"].shape
    assert L >= layers
    assert IN_P == _round_up(2 * half + cond_dim, 128), "packed params don't match x/cond dims"

    in_dtype = packed["w1"].dtype      # bf16 input path when weights are bf16
    in_itemsize = jnp.dtype(in_dtype).itemsize

    # --- batch tiling ------------------------------------------------------ #
    G = 16  # tile granularity: safe for both bf16 (16,128) and f32 (8,128) tiling
    TB = max(G, min(_round_up(block_batch, G), _round_up(B, G)))
    # v7x has 2 TensorCores and the batch axis is 'parallel': keep >=2 grid steps
    # whenever the batch can be split so both cores get work.
    if _round_up(B, G) >= 2 * G:
        TB = min(TB, _round_up(pl.cdiv(B, 2), G))

    # --- VMEM budget (derived for v7x's 64 MiB physical VMEM) -------------- #
    wkeys = ("w1", "b1", "w2", "b2", "w3", "b3")
    # Pallas allocates 2 pipeline buffers per operand even with a constant
    # index_map, so count the resident stacked weights twice.
    # TODO(synk): verify buffer count in the lowered MLIR / use
    # pipeline_mode=pl.Buffered(1) on the weight specs once that path is vetted.
    weight_bytes = 2 * sum(int(np.prod(packed[k].shape)) * packed[k].dtype.itemsize
                           for k in wkeys)

    def vmem_est(tb):
        io = 2 * (tb * IN_P * in_itemsize        # packed input (double buffered)
                  + tb * IN_P * x.dtype.itemsize  # packed y out
                  + tb * 8 * 4)                   # log_det out
        interm = tb * (IN_P + 2 * HP + 4 * IN_P) * 4 + 4 * tb * max(IN_P, HP) * 4
        return weight_bytes + io + interm

    VMEM_BUDGET = 56 * 2**20                      # headroom under v7x's 64 MiB
    while TB > G and vmem_est(TB) > VMEM_BUDGET:
        TB = _round_up(TB // 2, G)
    # TODO(synk): if resident weights alone exceed the budget (very large
    # hidden/layer counts), stream them per layer via a second 'arbitrary' grid axis.
    vmem_limit = int(min(64 * 2**20, max(16 * 2**20, int(1.3 * vmem_est(TB)))))
    B_pad = _round_up(B, TB)

    # --- layout glue: one packed [x_even | x_odd | cond] buffer ------------ #
    # TODO(synk): keep features stored pre-permuted (de-interleaved) upstream to
    # remove these strided HBM passes over x at large B.
    xc_in = jnp.zeros((B_pad, IN_P), jnp.float32)
    xc_in = xc_in.at[:B, 0:half].set(x[:, 0::2].astype(jnp.float32))
    xc_in = xc_in.at[:B, half:2 * half].set(x[:, 1::2].astype(jnp.float32))
    xc_in = xc_in.at[:B, 2 * half:2 * half + cond_dim].set(cond.astype(jnp.float32))
    xc_in = xc_in.astype(in_dtype)

    kernel = functools.partial(realnvp_fwd_kernel, layers=layers, in_p=IN_P)
    row_map = lambda i: (i, 0)
    w_map = lambda i: (0, 0, 0)        # constant block -> weights stay VMEM-resident

    y_packed, ld = pl.pallas_call(
        kernel,
        grid=(B_pad // TB,),
        in_specs=[
            pl.BlockSpec((TB, IN_P), row_map),         # packed x/cond rows
            pl.BlockSpec((L, IN_P, HP), w_map),        # w1 (K-packed)
            pl.BlockSpec((L, 1, HP), w_map),           # b1
            pl.BlockSpec((L, HP, HP), w_map),          # w2
            pl.BlockSpec((L, 1, HP), w_map),           # b2
            pl.BlockSpec((L, HP, 2 * IN_P), w_map),    # w3 (fused s|t, carry layout)
            pl.BlockSpec((L, 1, 2 * IN_P), w_map),     # b3
        ],
        out_specs=(
            pl.BlockSpec((TB, IN_P), row_map),
            pl.BlockSpec((TB, 8), row_map),
        ),
        out_shape=(
            jax.ShapeDtypeStruct((B_pad, IN_P), x.dtype),
            jax.ShapeDtypeStruct((B_pad, 8), jnp.float32),
        ),
        compiler_params=pltpu.CompilerParams(
            dimension_semantics=("parallel",),
            vmem_limit_bytes=vmem_limit,
        ),
    )(xc_in, packed["w1"], packed["b1"], packed["w2"], packed["b2"],
      packed["w3"], packed["b3"])

    # Layout glue: re-interleave even/odd halves back to original feature order.
    y_even = y_packed[:B, :half]
    y_odd = y_packed[:B, half:2 * half]
    y = jnp.stack([y_even, y_odd], axis=-1).reshape(B, dim)
    return y, ld[:B, 0]


# --------------------------------------------------------------------------- #
# Init + pure-JAX reference (mirrors the PyTorch module semantics)
# --------------------------------------------------------------------------- #
def init_params(key, dim, cond_dim, hidden, layers):
    half = dim // 2
    keys = jax.random.split(key, 6)
    scale = 0.2

    def rnd(k, shape):
        return scale * jax.random.normal(k, shape, jnp.float32)

    return {
        "w1a": rnd(keys[0], (layers, half, hidden)),
        "w1c": rnd(keys[1], (layers, cond_dim, hidden)),
        "b1": jnp.zeros((layers, 1, hidden), jnp.float32) + 0.01,
        "w2": rnd(keys[2], (layers, hidden, hidden)),
        "b2": jnp.zeros((layers, 1, hidden), jnp.float32) + 0.01,
        "w3s": rnd(keys[3], (layers, hidden, half)),
        "b3s": rnd(keys[4], (layers, 1, half)),
        "w3t": rnd(keys[5], (layers, hidden, half)),
        "b3t": jnp.zeros((layers, 1, half), jnp.float32),
    }


def realnvp_reference(x, cond, params, layers, dim):
    mask0 = np.zeros(dim, dtype=bool)
    mask0[::2] = True
    log_det = jnp.zeros((x.shape[0],), jnp.float32)
    for l in range(layers):
        m = mask0 if l % 2 == 0 else ~mask0
        xa = x[:, m]
        xb = x[:, ~m]
        W1 = jnp.concatenate([params["w1a"][l], params["w1c"][l]], axis=0)
        h = jnp.maximum(jnp.concatenate([xa, cond], -1) @ W1 + params["b1"][l, 0], 0.0)
        h = jnp.maximum(h @ params["w2"][l] + params["b2"][l, 0], 0.0)
        W3 = jnp.concatenate([params["w3s"][l], params["w3t"][l]], axis=1)
        b3 = jnp.concatenate([params["b3s"][l, 0], params["b3t"][l, 0]], axis=-1)
        st = h @ W3 + b3
        s, t = jnp.split(st, 2, axis=-1)
        s = jnp.tanh(s)
        yb = xb * jnp.exp(s) + t
        log_det = log_det + s.sum(-1)
        y = jnp.zeros_like(x)
        y = y.at[:, m].set(xa)
        y = y.at[:, ~m].set(yb)
        x = y
    return x, log_det


if __name__ == "__main__":
    B, dim, cond_dim, hidden, layers = 8, 8, 4, 32, 6

    key = jax.random.PRNGKey(0)
    kp, kx, kc = jax.random.split(key, 3)
    params = init_params(kp, dim, cond_dim, hidden, layers)
    x = jax.random.normal(kx, (B, dim), jnp.float32)
    cond = jax.random.normal(kc, (B, cond_dim), jnp.float32)

    # --- Check 1: f32 weights, tiny batch (single grid step), tight check ---
    packed_f32 = pack_params(params, weight_dtype=jnp.float32)
    y, log_det = realnvp_forward(x, cond, packed_f32, layers)
    jax.block_until_ready((y, log_det))
    y_ref, ld_ref = realnvp_reference(x, cond, params, layers, dim)
    np.testing.assert_allclose(np.asarray(y), np.asarray(y_ref), rtol=1e-2, atol=1e-3)
    np.testing.assert_allclose(np.asarray(log_det), np.asarray(ld_ref),
                               rtol=1e-2, atol=1e-3)

    # --- Check 2: ragged larger batch, f32 weights, multi-step grid (tight) ---
    B2 = 300  # deliberately not a multiple of the batch tile
    kx2, kc2 = jax.random.split(jax.random.PRNGKey(1), 2)
    x2 = jax.random.normal(kx2, (B2, dim), jnp.float32)
    c2 = jax.random.normal(kc2, (B2, cond_dim), jnp.float32)
    y2, ld2 = realnvp_forward(x2, c2, packed_f32, layers)
    jax.block_until_ready((y2, ld2))
    y2_ref, ld2_ref = realnvp_reference(x2, c2, params, layers, dim)
    np.testing.assert_allclose(np.asarray(y2), np.asarray(y2_ref), rtol=1e-2, atol=1e-3)
    np.testing.assert_allclose(np.asarray(ld2), np.asarray(ld2_ref), rtol=1e-2, atol=1e-3)

    # --- Check 3: default bf16 weight + bf16 input MXU path (coarse check) ---
    # (The kernel also rounds activations to bf16 before each GEMM while the
    #  reference keeps them f32 — accumulation stays f32 in both.)
    packed_bf16 = pack_params(params)            # bf16 is the performance default
    y3, ld3 = realnvp_forward(x2, c2, packed_bf16, layers)
    jax.block_until_ready((y3, ld3))
    rb = lambda a: a.astype(jnp.bfloat16).astype(jnp.float32)
    params_r = {k: (rb(v) if k.startswith("w") else v) for k, v in params.items()}
    y3_ref, ld3_ref = realnvp_reference(rb(x2), rb(c2), params_r, layers, dim)
    np.testing.assert_allclose(np.asarray(y3), np.asarray(y3_ref), rtol=1e-1, atol=1e-1)
    np.testing.assert_allclose(np.asarray(ld3), np.asarray(ld3_ref), rtol=1e-1, atol=1e-1)

    print("KERNEL_OK")
</pallas_src>

<mosaic_0001>
module attributes {stable_mosaic.version = 11 : i64} {
  func.func @realnvp_fwd_kernel(%arg0: i32, %arg1: memref<16x128xf32, #tpu.memory_space<vmem>>, %arg2: memref<6x128x128xf32, #tpu.memory_space<vmem>>, %arg3: memref<6x1x128xf32, #tpu.memory_space<vmem>>, %arg4: memref<6x128x128xf32, #tpu.memory_space<vmem>>, %arg5: memref<6x1x128xf32, #tpu.memory_space<vmem>>, %arg6: memref<6x128x256xf32, #tpu.memory_space<vmem>>, %arg7: memref<6x1x256xf32, #tpu.memory_space<vmem>>, %arg8: memref<16x128xf32, #tpu.memory_space<vmem>>, %arg9: memref<16x8xf32, #tpu.memory_space<vmem>>) attributes {dimension_semantics = [#tpu.dimension_semantics<parallel>], iteration_bounds = array<i64: 1>, scalar_prefetch = 0 : i64, scratch_operands = 0 : i64, tpu.core_type = #tpu.core_type<tc>, window_params = [{transform_indices = @transform_0, window_bounds = array<i64: 16, 128>}, {pipeline_mode = #tpu.pipeline_mode<synchronous>, transform_indices = @transform_1, window_bounds = array<i64: 6, 128, 128>}, {pipeline_mode = #tpu.pipeline_mode<synchronous>, transform_indices = @transform_2, window_bounds = array<i64: 6, 1, 128>}, {pipeline_mode = #tpu.pipeline_mode<synchronous>, transform_indices = @transform_3, window_bounds = array<i64: 6, 128, 128>}, {pipeline_mode = #tpu.pipeline_mode<synchronous>, transform_indices = @transform_4, window_bounds = array<i64: 6, 1, 128>}, {pipeline_mode = #tpu.pipeline_mode<synchronous>, transform_indices = @transform_5, window_bounds = array<i64: 6, 128, 256>}, {pipeline_mode = #tpu.pipeline_mode<synchronous>, transform_indices = @transform_6, window_bounds = array<i64: 6, 1, 256>}, {transform_indices = @transform_7, window_bounds = array<i64: 16, 128>}, {transform_indices = @transform_8, window_bounds = array<i64: 16, 8>}]} {
    %c0 = arith.constant 0 : index
    %c0_0 = arith.constant 0 : index
    %0 = vector.load %arg1[%c0, %c0_0] : memref<16x128xf32, #tpu.memory_space<vmem>>, vector<16x128xf32>
    %cst = arith.constant 0.000000e+00 : f32
    %1 = vector.broadcast %cst : f32 to vector<16x1xf32>
    %c0_1 = arith.constant 0 : index
    %c0_2 = arith.constant 0 : index
    %c0_3 = arith.constant 0 : index
    %2 = vector.load %arg2[%c0_1, %c0_2, %c0_3] : memref<6x128x128xf32, #tpu.memory_space<vmem>>, vector<1x128x128xf32>
    %3 = vector.shape_cast %2 : vector<1x128x128xf32> to vector<128x128xf32>
    %cst_4 = arith.constant dense<0.000000e+00> : vector<16x128xf32>
    %4 = tpu.matmul %0, %3, %cst_4 {dimension_numbers = #tpu.dot_dimension_numbers<[1], [0], [0], [1], [0, 0, 1, 1], [], []>} : vector<16x128xf32>, vector<128x128xf32>, vector<16x128xf32> -> vector<16x128xf32>
    %c0_5 = arith.constant 0 : index
    %c0_6 = arith.constant 0 : index
    %c0_7 = arith.constant 0 : index
    %5 = vector.load %arg3[%c0_5, %c0_6, %c0_7] : memref<6x1x128xf32, #tpu.memory_space<vmem>>, vector<1x1x128xf32>
    %6 = vector.shape_cast %5 : vector<1x1x128xf32> to vector<1x128xf32>
    %7 = vector.broadcast %6 : vector<1x128xf32> to vector<16x128xf32>
    %8 = arith.addf %4, %7 : vector<16x128xf32>
    %cst_8 = arith.constant 0.000000e+00 : f32
    %9 = vector.broadcast %cst_8 : f32 to vector<16x128xf32>
    %10 = arith.maximumf %8, %9 : vector<16x128xf32>
    %c0_9 = arith.constant 0 : index
    %c0_10 = arith.constant 0 : index
    %c0_11 = arith.constant 0 : index
    %11 = vector.load %arg4[%c0_9, %c0_10, %c0_11] : memref<6x128x128xf32, #tpu.memory_space<vmem>>, vector<1x128x128xf32>
    %12 = vector.shape_cast %11 : vector<1x128x128xf32> to vector<128x128xf32>
    %cst_12 = arith.constant dense<0.000000e+00> : vector<16x128xf32>
    %13 = tpu.matmul %10, %12, %cst_12 {dimension_numbers = #tpu.dot_dimension_numbers<[1], [0], [0], [1], [0, 0, 1, 1], [], []>} : vector<16x128xf32>, vector<128x128xf32>, vector<16x128xf32> -> vector<16x128xf32>
    %c0_13 = arith.constant 0 : index
    %c0_14 = arith.constant 0 : index
    %c0_15 = arith.constant 0 : index
    %14 = vector.load %arg5[%c0_13, %c0_14, %c0_15] : memref<6x1x128xf32, #tpu.memory_space<vmem>>, vector<1x1x128xf32>
    %15 = vector.shape_cast %14 : vector<1x1x128xf32> to vector<1x128xf32>
    %16 = vector.broadcast %15 : vector<1x128xf32> to vector<16x128xf32>
    %17 = arith.addf %13, %16 : vector<16x128xf32>
    %cst_16 = arith.constant 0.000000e+00 : f32
    %18 = vector.broadcast %cst_16 : f32 to vector<16x128xf32>
    %19 = arith.maximumf %17, %18 : vector<16x128xf32>
    %c0_17 = arith.constant 0 : index
    %c0_18 = arith.constant 0 : index
    %c0_19 = arith.constant 0 : index
    %20 = vector.load %arg6[%c0_17, %c0_18, %c0_19] : memref<6x128x256xf32, #tpu.memory_space<vmem>>, vector<1x128x256xf32>
    %21 = vector.shape_cast %20 : vector<1x128x256xf32> to vector<128x256xf32>
    %cst_20 = arith.constant dense<0.000000e+00> : vector<16x256xf32>
    %22 = tpu.matmul %19, %21, %cst_20 {dimension_numbers = #tpu.dot_dimension_numbers<[1], [0], [0], [1], [0, 0, 1, 1], [], []>} : vector<16x128xf32>, vector<128x256xf32>, vector<16x256xf32> -> vector<16x256xf32>
    %c0_21 = arith.constant 0 : index
    %c0_22 = arith.constant 0 : index
    %c0_23 = arith.constant 0 : index
    %23 = vector.load %arg7[%c0_21, %c0_22, %c0_23] : memref<6x1x256xf32, #tpu.memory_space<vmem>>, vector<1x1x256xf32>
    %24 = vector.shape_cast %23 : vector<1x1x256xf32> to vector<1x256xf32>
    %25 = vector.broadcast %24 : vector<1x256xf32> to vector<16x256xf32>
    %26 = arith.addf %22, %25 : vector<16x256xf32>
    %27 = vector.extract_strided_slice %26 {offsets = [0, 0], sizes = [16, 128], strides = [1, 1]} : vector<16x256xf32> to vector<16x128xf32>
    %28 = math.tanh %27 : vector<16x128xf32>
    %29 = vector.extract_strided_slice %26 {offsets = [0, 128], sizes = [16, 128], strides = [1, 1]} : vector<16x256xf32> to vector<16x128xf32>
    %30 = math.exp %28 : vector<16x128xf32>
    %31 = arith.mulf %0, %30 : vector<16x128xf32>
    %32 = arith.addf %31, %29 : vector<16x128xf32>
    %cst_24 = arith.constant dense<0.000000e+00> : vector<16xf32>
    %33 = vector.multi_reduction <add>, %28, %cst_24 [1] : vector<16x128xf32> to vector<16xf32>
    %34 = vector.shape_cast %33 : vector<16xf32> to vector<16x1xf32>
    %35 = arith.addf %1, %34 : vector<16x1xf32>
    %c1 = arith.constant 1 : index
    %c0_25 = arith.constant 0 : index
    %c0_26 = arith.constant 0 : index
    %36 = vector.load %arg2[%c1, %c0_25, %c0_26] : memref<6x128x128xf32, #tpu.memory_space<vmem>>, vector<1x128x128xf32>
    %37 = vector.shape_cast %36 : vector<1x128x128xf32> to vector<128x128xf32>
    %cst_27 = arith.constant dense<0.000000e+00> : vector<16x128xf32>
    %38 = tpu.matmul %32, %37, %cst_27 {dimension_numbers = #tpu.dot_dimension_numbers<[1], [0], [0], [1], [0, 0, 1, 1], [], []>} : vector<16x128xf32>, vector<128x128xf32>, vector<16x128xf32> -> vector<16x128xf32>
    %c1_28 = arith.constant 1 : index
    %c0_29 = arith.constant 0 : index
    %c0_30 = arith.constant 0 : index
    %39 = vector.load %arg3[%c1_28, %c0_29, %c0_30] : memref<6x1x128xf32, #tpu.memory_space<vmem>>, vector<1x1x128xf32>
    %40 = vector.shape_cast %39 : vector<1x1x128xf32> to vector<1x128xf32>
    %41 = vector.broadcast %40 : vector<1x128xf32> to vector<16x128xf32>
    %42 = arith.addf %38, %41 : vector<16x128xf32>
    %cst_31 = arith.constant 0.000000e+00 : f32
    %43 = vector.broadcast %cst_31 : f32 to vector<16x128xf32>
    %44 = arith.maximumf %42, %43 : vector<16x128xf32>
    %c1_32 = arith.constant 1 : index
    %c0_33 = arith.constant 0 : index
    %c0_34 = arith.constant 0 : index
    %45 = vector.load %arg4[%c1_32, %c0_33, %c0_34] : memref<6x128x128xf32, #tpu.memory_space<vmem>>, vector<1x128x128xf32>
    %46 = vector.shape_cast %45 : vector<1x128x128xf32> to vector<128x128xf32>
    %cst_35 = arith.constant dense<0.000000e+00> : vector<16x128xf32>
    %47 = tpu.matmul %44, %46, %cst_35 {dimension_numbers = #tpu.dot_dimension_numbers<[1], [0], [0], [1], [0, 0, 1, 1], [], []>} : vector<16x128xf32>, vector<128x128xf32>, vector<16x128xf32> -> vector<16x128xf32>
    %c1_36 = arith.constant 1 : index
    %c0_37 = arith.constant 0 : index
    %c0_38 = arith.constant 0 : index
    %48 = vector.load %arg5[%c1_36, %c0_37, %c0_38] : memref<6x1x128xf32, #tpu.memory_space<vmem>>, vector<1x1x128xf32>
    %49 = vector.shape_cast %48 : vector<1x1x128xf32> to vector<1x128xf32>
    %50 = vector.broadcast %49 : vector<1x128xf32> to vector<16x128xf32>
    %51 = arith.addf %47, %50 : vector<16x128xf32>
    %cst_39 = arith.constant 0.000000e+00 : f32
    %52 = vector.broadcast %cst_39 : f32 to vector<16x128xf32>
    %53 = arith.maximumf %51, %52 : vector<16x128xf32>
    %c1_40 = arith.constant 1 : index
    %c0_41 = arith.constant 0 : index
    %c0_42 = arith.constant 0 : index
    %54 = vector.load %arg6[%c1_40, %c0_41, %c0_42] : memref<6x128x256xf32, #tpu.memory_space<vmem>>, vector<1x128x256xf32>
    %55 = vector.shape_cast %54 : vector<1x128x256xf32> to vector<128x256xf32>
    %cst_43 = arith.constant dense<0.000000e+00> : vector<16x256xf32>
    %56 = tpu.matmul %53, %55, %cst_43 {dimension_numbers = #tpu.dot_dimension_numbers<[1], [0], [0], [1], [0, 0, 1, 1], [], []>} : vector<16x128xf32>, vector<128x256xf32>, vector<16x256xf32> -> vector<16x256xf32>
    %c1_44 = arith.constant 1 : index
    %c0_45 = arith.constant 0 : index
    %c0_46 = arith.constant 0 : index
    %57 = vector.load %arg7[%c1_44, %c0_45, %c0_46] : memref<6x1x256xf32, #tpu.memory_space<vmem>>, vector<1x1x256xf32>
    %58 = vector.shape_cast %57 : vector<1x1x256xf32> to vector<1x256xf32>
    %59 = vector.broadcast %58 : vector<1x256xf32> to vector<16x256xf32>
    %60 = arith.addf %56, %59 : vector<16x256xf32>
    %61 = vector.extract_strided_slice %60 {offsets = [0, 0], sizes = [16, 128], strides = [1, 1]} : vector<16x256xf32> to vector<16x128xf32>
    %62 = math.tanh %61 : vector<16x128xf32>
    %63 = vector.extract_strided_slice %60 {offsets = [0, 128], sizes = [16, 128], strides = [1, 1]} : vector<16x256xf32> to vector<16x128xf32>
    %64 = math.exp %62 : vector<16x128xf32>
    %65 = arith.mulf %32, %64 : vector<16x128xf32>
    %66 = arith.addf %65, %63 : vector<16x128xf32>
    %cst_47 = arith.constant dense<0.000000e+00> : vector<16xf32>
    %67 = vector.multi_reduction <add>, %62, %cst_47 [1] : vector<16x128xf32> to vector<16xf32>
    %68 = vector.shape_cast %67 : vector<16xf32> to vector<16x1xf32>
    %69 = arith.addf %35, %68 : vector<16x1xf32>
    %c2 = arith.constant 2 : index
    %c0_48 = arith.constant 0 : index
    %c0_49 = arith.constant 0 : index
    %70 = vector.load %arg2[%c2, %c0_48, %c0_49] : memref<6x128x128xf32, #tpu.memory_space<vmem>>, vector<1x128x128xf32>
    %71 = vector.shape_cast %70 : vector<1x128x128xf32> to vector<128x128xf32>
    %cst_50 = arith.constant dense<0.000000e+00> : vector<16x128xf32>
    %72 = tpu.matmul %66, %71, %cst_50 {dimension_numbers = #tpu.dot_dimension_numbers<[1], [0], [0], [1], [0, 0, 1, 1], [], []>} : vector<16x128xf32>, vector<128x128xf32>, vector<16x128xf32> -> vector<16x128xf32>
    %c2_51 = arith.constant 2 : index
    %c0_52 = arith.constant 0 : index
    %c0_53 = arith.constant 0 : index
    %73 = vector.load %arg3[%c2_51, %c0_52, %c0_53] : memref<6x1x128xf32, #tpu.memory_space<vmem>>, vector<1x1x128xf32>
    %74 = vector.shape_cast %73 : vector<1x1x128xf32> to vector<1x128xf32>
    %75 = vector.broadcast %74 : vector<1x128xf32> to vector<16x128xf32>
    %76 = arith.addf %72, %75 : vector<16x128xf32>
    %cst_54 = arith.constant 0.000000e+00 : f32
    %77 = vector.broadcast %cst_54 : f32 to vector<16x128xf32>
    %78 = arith.maximumf %76, %77 : vector<16x128xf32>
    %c2_55 = arith.constant 2 : index
    %c0_56 = arith.constant 0 : index
    %c0_57 = arith.constant 0 : index
    %79 = vector.load %arg4[%c2_55, %c0_56, %c0_57] : memref<6x128x128xf32, #tpu.memory_space<vmem>>, vector<1x128x128xf32>
    %80 = vector.shape_cast %79 : vector<1x128x128xf32> to vector<128x128xf32>
    %cst_58 = arith.constant dense<0.000000e+00> : vector<16x128xf32>
    %81 = tpu.matmul %78, %80, %cst_58 {dimension_numbers = #tpu.dot_dimension_numbers<[1], [0], [0], [1], [0, 0, 1, 1], [], []>} : vector<16x128xf32>, vector<128x128xf32>, vector<16x128xf32> -> vector<16x128xf32>
    %c2_59 = arith.constant 2 : index
    %c0_60 = arith.constant 0 : index
    %c0_61 = arith.constant 0 : index
    %82 = vector.load %arg5[%c2_59, %c0_60, %c0_61] : memref<6x1x128xf32, #tpu.memory_space<vmem>>, vector<1x1x128xf32>
    %83 = vector.shape_cast %82 : vector<1x1x128xf32> to vector<1x128xf32>
    %84 = vector.broadcast %83 : vector<1x128xf32> to vector<16x128xf32>
    %85 = arith.addf %81, %84 : vector<16x128xf32>
    %cst_62 = arith.constant 0.000000e+00 : f32
    %86 = vector.broadcast %cst_62 : f32 to vector<16x128xf32>
    %87 = arith.maximumf %85, %86 : vector<16x128xf32>
    %c2_63 = arith.constant 2 : index
    %c0_64 = arith.constant 0 : index
    %c0_65 = arith.constant 0 : index
    %88 = vector.load %arg6[%c2_63, %c0_64, %c0_65] : memref<6x128x256xf32, #tpu.memory_space<vmem>>, vector<1x128x256xf32>
    %89 = vector.shape_cast %88 : vector<1x128x256xf32> to vector<128x256xf32>
    %cst_66 = arith.constant dense<0.000000e+00> : vector<16x256xf32>
    %90 = tpu.matmul %87, %89, %cst_66 {dimension_numbers = #tpu.dot_dimension_numbers<[1], [0], [0], [1], [0, 0, 1, 1], [], []>} : vector<16x128xf32>, vector<128x256xf32>, vector<16x256xf32> -> vector<16x256xf32>
    %c2_67 = arith.constant 2 : index
    %c0_68 = arith.constant 0 : index
    %c0_69 = arith.constant 0 : index
    %91 = vector.load %arg7[%c2_67, %c0_68, %c0_69] : memref<6x1x256xf32, #tpu.memory_space<vmem>>, vector<1x1x256xf32>
    %92 = vector.shape_cast %91 : vector<1x1x256xf32> to vector<1x256xf32>
    %93 = vector.broadcast %92 : vector<1x256xf32> to vector<16x256xf32>
    %94 = arith.addf %90, %93 : vector<16x256xf32>
    %95 = vector.extract_strided_slice %94 {offsets = [0, 0], sizes = [16, 128], strides = [1, 1]} : vector<16x256xf32> to vector<16x128xf32>
    %96 = math.tanh %95 : vector<16x128xf32>
    %97 = vector.extract_strided_slice %94 {offsets = [0, 128], sizes = [16, 128], strides = [1, 1]} : vector<16x256xf32> to vector<16x128xf32>
    %98 = math.exp %96 : vector<16x128xf32>
    %99 = arith.mulf %66, %98 : vector<16x128xf32>
    %100 = arith.addf %99, %97 : vector<16x128xf32>
    %cst_70 = arith.constant dense<0.000000e+00> : vector<16xf32>
    %101 = vector.multi_reduction <add>, %96, %cst_70 [1] : vector<16x128xf32> to vector<16xf32>
    %102 = vector.shape_cast %101 : vector<16xf32> to vector<16x1xf32>
    %103 = arith.addf %69, %102 : vector<16x1xf32>
    %c3 = arith.constant 3 : index
    %c0_71 = arith.constant 0 : index
    %c0_72 = arith.constant 0 : index
    %104 = vector.load %arg2[%c3, %c0_71, %c0_72] : memref<6x128x128xf32, #tpu.memory_space<vmem>>, vector<1x128x128xf32>
    %105 = vector.shape_cast %104 : vector<1x128x128xf32> to vector<128x128xf32>
    %cst_73 = arith.constant dense<0.000000e+00> : vector<16x128xf32>
    %106 = tpu.matmul %100, %105, %cst_73 {dimension_numbers = #tpu.dot_dimension_numbers<[1], [0], [0], [1], [0, 0, 1, 1], [], []>} : vector<16x128xf32>, vector<128x128xf32>, vector<16x128xf32> -> vector<16x128xf32>
    %c3_74 = arith.constant 3 : index
    %c0_75 = arith.constant 0 : index
    %c0_76 = arith.constant 0 : index
    %107 = vector.load %arg3[%c3_74, %c0_75, %c0_76] : memref<6x1x128xf32, #tpu.memory_space<vmem>>, vector<1x1x128xf32>
    %108 = vector.shape_cast %107 : vector<1x1x128xf32> to vector<1x128xf32>
    %109 = vector.broadcast %108 : vector<1x128xf32> to vector<16x128xf32>
    %110 = arith.addf %106, %109 : vector<16x128xf32>
    %cst_77 = arith.constant 0.000000e+00 : f32
    %111 = vector.broadcast %cst_77 : f32 to vector<16x128xf32>
    %112 = arith.maximumf %110, %111 : vector<16x128xf32>
    %c3_78 = arith.constant 3 : index
    %c0_79 = arith.constant 0 : index
    %c0_80 = arith.constant 0 : index
    %113 = vector.load %arg4[%c3_78, %c0_79, %c0_80] : memref<6x128x128xf32, #tpu.memory_space<vmem>>, vector<1x128x128xf32>
    %114 = vector.shape_cast %113 : vector<1x128x128xf32> to vector<128x128xf32>
    %cst_81 = arith.constant dense<0.000000e+00> : vector<16x128xf32>
    %115 = tpu.matmul %112, %114, %cst_81 {dimension_numbers = #tpu.dot_dimension_numbers<[1], [0], [0], [1], [0, 0, 1, 1], [], []>} : vector<16x128xf32>, vector<128x128xf32>, vector<16x128xf32> -> vector<16x128xf32>
    %c3_82 = arith.constant 3 : index
    %c0_83 = arith.constant 0 : index
    %c0_84 = arith.constant 0 : index
    %116 = vector.load %arg5[%c3_82, %c0_83, %c0_84] : memref<6x1x128xf32, #tpu.memory_space<vmem>>, vector<1x1x128xf32>
    %117 = vector.shape_cast %116 : vector<1x1x128xf32> to vector<1x128xf32>
    %118 = vector.broadcast %117 : vector<1x128xf32> to vector<16x128xf32>
    %119 = arith.addf %115, %118 : vector<16x128xf32>
    %cst_85 = arith.constant 0.000000e+00 : f32
    %120 = vector.broadcast %cst_85 : f32 to vector<16x128xf32>
    %121 = arith.maximumf %119, %120 : vector<16x128xf32>
    %c3_86 = arith.constant 3 : index
    %c0_87 = arith.constant 0 : index
    %c0_88 = arith.constant 0 : index
    %122 = vector.load %arg6[%c3_86, %c0_87, %c0_88] : memref<6x128x256xf32, #tpu.memory_space<vmem>>, vector<1x128x256xf32>
    %123 = vector.shape_cast %122 : vector<1x128x256xf32> to vector<128x256xf32>
    %cst_89 = arith.constant dense<0.000000e+00> : vector<16x256xf32>
    %124 = tpu.matmul %121, %123, %cst_89 {dimension_numbers = #tpu.dot_dimension_numbers<[1], [0], [0], [1], [0, 0, 1, 1], [], []>} : vector<16x128xf32>, vector<128x256xf32>, vector<16x256xf32> -> vector<16x256xf32>
    %c3_90 = arith.constant 3 : index
    %c0_91 = arith.constant 0 : index
    %c0_92 = arith.constant 0 : index
    %125 = vector.load %arg7[%c3_90, %c0_91, %c0_92] : memref<6x1x256xf32, #tpu.memory_space<vmem>>, vector<1x1x256xf32>
    %126 = vector.shape_cast %125 : vector<1x1x256xf32> to vector<1x256xf32>
    %127 = vector.broadcast %126 : vector<1x256xf32> to vector<16x256xf32>
    %128 = arith.addf %124, %127 : vector<16x256xf32>
    %129 = vector.extract_strided_slice %128 {offsets = [0, 0], sizes = [16, 128], strides = [1, 1]} : vector<16x256xf32> to vector<16x128xf32>
    %130 = math.tanh %129 : vector<16x128xf32>
    %131 = vector.extract_strided_slice %128 {offsets = [0, 128], sizes = [16, 128], strides = [1, 1]} : vector<16x256xf32> to vector<16x128xf32>
    %132 = math.exp %130 : vector<16x128xf32>
    %133 = arith.mulf %100, %132 : vector<16x128xf32>
    %134 = arith.addf %133, %131 : vector<16x128xf32>
    %cst_93 = arith.constant dense<0.000000e+00> : vector<16xf32>
    %135 = vector.multi_reduction <add>, %130, %cst_93 [1] : vector<16x128xf32> to vector<16xf32>
    %136 = vector.shape_cast %135 : vector<16xf32> to vector<16x1xf32>
    %137 = arith.addf %103, %136 : vector<16x1xf32>
    %c4 = arith.constant 4 : index
    %c0_94 = arith.constant 0 : index
    %c0_95 = arith.constant 0 : index
    %138 = vector.load %arg2[%c4, %c0_94, %c0_95] : memref<6x128x128xf32, #tpu.memory_space<vmem>>, vector<1x128x128xf32>
    %139 = vector.shape_cast %138 : vector<1x128x128xf32> to vector<128x128xf32>
    %cst_96 = arith.constant dense<0.000000e+00> : vector<16x128xf32>
    %140 = tpu.matmul %134, %139, %cst_96 {dimension_numbers = #tpu.dot_dimension_numbers<[1], [0], [0], [1], [0, 0, 1, 1], [], []>} : vector<16x128xf32>, vector<128x128xf32>, vector<16x128xf32> -> vector<16x128xf32>
    %c4_97 = arith.constant 4 : index
    %c0_98 = arith.constant 0 : index
    %c0_99 = arith.constant 0 : index
    %141 = vector.load %arg3[%c4_97, %c0_98, %c0_99] : memref<6x1x128xf32, #tpu.memory_space<vmem>>, vector<1x1x128xf32>
    %142 = vector.shape_cast %141 : vector<1x1x128xf32> to vector<1x128xf32>
    %143 = vector.broadcast %142 : vector<1x128xf32> to vector<16x128xf32>
    %144 = arith.addf %140, %143 : vector<16x128xf32>
    %cst_100 = arith.constant 0.000000e+00 : f32
    %145 = vector.broadcast %cst_100 : f32 to vector<16x128xf32>
    %146 = arith.maximumf %144, %145 : vector<16x128xf32>
    %c4_101 = arith.constant 4 : index
    %c0_102 = arith.constant 0 : index
    %c0_103 = arith.constant 0 : index
    %147 = vector.load %arg4[%c4_101, %c0_102, %c0_103] : memref<6x128x128xf32, #tpu.memory_space<vmem>>, vector<1x128x128xf32>
    %148 = vector.shape_cast %147 : vector<1x128x128xf32> to vector<128x128xf32>
    %cst_104 = arith.constant dense<0.000000e+00> : vector<16x128xf32>
    %149 = tpu.matmul %146, %148, %cst_104 {dimension_numbers = #tpu.dot_dimension_numbers<[1], [0], [0], [1], [0, 0, 1, 1], [], []>} : vector<16x128xf32>, vector<128x128xf32>, vector<16x128xf32> -> vector<16x128xf32>
    %c4_105 = arith.constant 4 : index
    %c0_106 = arith.constant 0 : index
    %c0_107 = arith.constant 0 : index
    %150 = vector.load %arg5[%c4_105, %c0_106, %c0_107] : memref<6x1x128xf32, #tpu.memory_space<vmem>>, vector<1x1x128xf32>
    %151 = vector.shape_cast %150 : vector<1x1x128xf32> to vector<1x128xf32>
    %152 = vector.broadcast %151 : vector<1x128xf32> to vector<16x128xf32>
    %153 = arith.addf %149, %152 : vector<16x128xf32>
    %cst_108 = arith.constant 0.000000e+00 : f32
    %154 = vector.broadcast %cst_108 : f32 to vector<16x128xf32>
    %155 = arith.maximumf %153, %154 : vector<16x128xf32>
    %c4_109 = arith.constant 4 : index
    %c0_110 = arith.constant 0 : index
    %c0_111 = arith.constant 0 : index
    %156 = vector.load %arg6[%c4_109, %c0_110, %c0_111] : memref<6x128x256xf32, #tpu.memory_space<vmem>>, vector<1x128x256xf32>
    %157 = vector.shape_cast %156 : vector<1x128x256xf32> to vector<128x256xf32>
    %cst_112 = arith.constant dense<0.000000e+00> : vector<16x256xf32>
    %158 = tpu.matmul %155, %157, %cst_112 {dimension_numbers = #tpu.dot_dimension_numbers<[1], [0], [0], [1], [0, 0, 1, 1], [], []>} : vector<16x128xf32>, vector<128x256xf32>, vector<16x256xf32> -> vector<16x256xf32>
    %c4_113 = arith.constant 4 : index
    %c0_114 = arith.constant 0 : index
    %c0_115 = arith.constant 0 : index
    %159 = vector.load %arg7[%c4_113, %c0_114, %c0_115] : memref<6x1x256xf32, #tpu.memory_space<vmem>>, vector<1x1x256xf32>
    %160 = vector.shape_cast %159 : vector<1x1x256xf32> to vector<1x256xf32>
    %161 = vector.broadcast %160 : vector<1x256xf32> to vector<16x256xf32>
    %162 = arith.addf %158, %161 : vector<16x256xf32>
    %163 = vector.extract_strided_slice %162 {offsets = [0, 0], sizes = [16, 128], strides = [1, 1]} : vector<16x256xf32> to vector<16x128xf32>
    %164 = math.tanh %163 : vector<16x128xf32>
    %165 = vector.extract_strided_slice %162 {offsets = [0, 128], sizes = [16, 128], strides = [1, 1]} : vector<16x256xf32> to vector<16x128xf32>
    %166 = math.exp %164 : vector<16x128xf32>
    %167 = arith.mulf %134, %166 : vector<16x128xf32>
    %168 = arith.addf %167, %165 : vector<16x128xf32>
    %cst_116 = arith.constant dense<0.000000e+00> : vector<16xf32>
    %169 = vector.multi_reduction <add>, %164, %cst_116 [1] : vector<16x128xf32> to vector<16xf32>
    %170 = vector.shape_cast %169 : vector<16xf32> to vector<16x1xf32>
    %171 = arith.addf %137, %170 : vector<16x1xf32>
    %c5 = arith.constant 5 : index
    %c0_117 = arith.constant 0 : index
    %c0_118 = arith.constant 0 : index
    %172 = vector.load %arg2[%c5, %c0_117, %c0_118] : memref<6x128x128xf32, #tpu.memory_space<vmem>>, vector<1x128x128xf32>
    %173 = vector.shape_cast %172 : vector<1x128x128xf32> to vector<128x128xf32>
    %cst_119 = arith.constant dense<0.000000e+00> : vector<16x128xf32>
    %174 = tpu.matmul %168, %173, %cst_119 {dimension_numbers = #tpu.dot_dimension_numbers<[1], [0], [0], [1], [0, 0, 1, 1], [], []>} : vector<16x128xf32>, vector<128x128xf32>, vector<16x128xf32> -> vector<16x128xf32>
    %c5_120 = arith.constant 5 : index
    %c0_121 = arith.constant 0 : index
    %c0_122 = arith.constant 0 : index
    %175 = vector.load %arg3[%c5_120, %c0_121, %c0_122] : memref<6x1x128xf32, #tpu.memory_space<vmem>>, vector<1x1x128xf32>
    %176 = vector.shape_cast %175 : vector<1x1x128xf32> to vector<1x128xf32>
    %177 = vector.broadcast %176 : vector<1x128xf32> to vector<16x128xf32>
    %178 = arith.addf %174, %177 : vector<16x128xf32>
    %cst_123 = arith.constant 0.000000e+00 : f32
    %179 = vector.broadcast %cst_123 : f32 to vector<16x128xf32>
    %180 = arith.maximumf %178, %179 : vector<16x128xf32>
    %c5_124 = arith.constant 5 : index
    %c0_125 = arith.constant 0 : index
    %c0_126 = arith.constant 0 : index
    %181 = vector.load %arg4[%c5_124, %c0_125, %c0_126] : memref<6x128x128xf32, #tpu.memory_space<vmem>>, vector<1x128x128xf32>
    %182 = vector.shape_cast %181 : vector<1x128x128xf32> to vector<128x128xf32>
    %cst_127 = arith.constant dense<0.000000e+00> : vector<16x128xf32>
    %183 = tpu.matmul %180, %182, %cst_127 {dimension_numbers = #tpu.dot_dimension_numbers<[1], [0], [0], [1], [0, 0, 1, 1], [], []>} : vector<16x128xf32>, vector<128x128xf32>, vector<16x128xf32> -> vector<16x128xf32>
    %c5_128 = arith.constant 5 : index
    %c0_129 = arith.constant 0 : index
    %c0_130 = arith.constant 0 : index
    %184 = vector.load %arg5[%c5_128, %c0_129, %c0_130] : memref<6x1x128xf32, #tpu.memory_space<vmem>>, vector<1x1x128xf32>
    %185 = vector.shape_cast %184 : vector<1x1x128xf32> to vector<1x128xf32>
    %186 = vector.broadcast %185 : vector<1x128xf32> to vector<16x128xf32>
    %187 = arith.addf %183, %186 : vector<16x128xf32>
    %cst_131 = arith.constant 0.000000e+00 : f32
    %188 = vector.broadcast %cst_131 : f32 to vector<16x128xf32>
    %189 = arith.maximumf %187, %188 : vector<16x128xf32>
    %c5_132 = arith.constant 5 : index
    %c0_133 = arith.constant 0 : index
    %c0_134 = arith.constant 0 : index
    %190 = vector.load %arg6[%c5_132, %c0_133, %c0_134] : memref<6x128x256xf32, #tpu.memory_space<vmem>>, vector<1x128x256xf32>
    %191 = vector.shape_cast %190 : vector<1x128x256xf32> to vector<128x256xf32>
    %cst_135 = arith.constant dense<0.000000e+00> : vector<16x256xf32>
    %192 = tpu.matmul %189, %191, %cst_135 {dimension_numbers = #tpu.dot_dimension_numbers<[1], [0], [0], [1], [0, 0, 1, 1], [], []>} : vector<16x128xf32>, vector<128x256xf32>, vector<16x256xf32> -> vector<16x256xf32>
    %c5_136 = arith.constant 5 : index
    %c0_137 = arith.constant 0 : index
    %c0_138 = arith.constant 0 : index
    %193 = vector.load %arg7[%c5_136, %c0_137, %c0_138] : memref<6x1x256xf32, #tpu.memory_space<vmem>>, vector<1x1x256xf32>
    %194 = vector.shape_cast %193 : vector<1x1x256xf32> to vector<1x256xf32>
    %195 = vector.broadcast %194 : vector<1x256xf32> to vector<16x256xf32>
    %196 = arith.addf %192, %195 : vector<16x256xf32>
    %197 = vector.extract_strided_slice %196 {offsets = [0, 0], sizes = [16, 128], strides = [1, 1]} : vector<16x256xf32> to vector<16x128xf32>
    %198 = math.tanh %197 : vector<16x128xf32>
    %199 = vector.extract_strided_slice %196 {offsets = [0, 128], sizes = [16, 128], strides = [1, 1]} : vector<16x256xf32> to vector<16x128xf32>
    %200 = math.exp %198 : vector<16x128xf32>
    %201 = arith.mulf %168, %200 : vector<16x128xf32>
    %202 = arith.addf %201, %199 : vector<16x128xf32>
    %cst_139 = arith.constant dense<0.000000e+00> : vector<16xf32>
    %203 = vector.multi_reduction <add>, %198, %cst_139 [1] : vector<16x128xf32> to vector<16xf32>
    %204 = vector.shape_cast %203 : vector<16xf32> to vector<16x1xf32>
    %205 = arith.addf %171, %204 : vector<16x1xf32>
    %c0_140 = arith.constant 0 : index
    %c0_141 = arith.constant 0 : index
    %206 = vector.load %arg8[%c0_140, %c0_141] : memref<16x128xf32, #tpu.memory_space<vmem>>, vector<16x128xf32>
    tpu.vector_store %arg8[%c0_140, %c0_141], %202 {strides = array<i32>} : memref<16x128xf32, #tpu.memory_space<vmem>>, vector<16x128xf32>,
    %207 = vector.shape_cast %205 : vector<16x1xf32> to vector<16x1xf32>
    %208 = vector.broadcast %207 : vector<16x1xf32> to vector<16x8xf32>
    %c0_142 = arith.constant 0 : index
    %c0_143 = arith.constant 0 : index
    %209 = vector.load %arg9[%c0_142, %c0_143] : memref<16x8xf32, #tpu.memory_space<vmem>>, vector<16x8xf32>
    tpu.vector_store %arg9[%c0_142, %c0_143], %208 {strides = array<i32>} : memref<16x8xf32, #tpu.memory_space<vmem>>, vector<16x8xf32>,
    return
  }
  func.func @transform_0(%arg0: i32) -> (i32, i32) {
    %c0_i32 = arith.constant 0 : i32
    %c0_i32_0 = arith.constant 0 : i32
    return %arg0, %c0_i32 : i32, i32
  }
  func.func @transform_1(%arg0: i32) -> (i32, i32, i32) {
    %c0_i32 = arith.constant 0 : i32
    %c0_i32_0 = arith.constant 0 : i32
    %c0_i32_1 = arith.constant 0 : i32
    %c0_i32_2 = arith.constant 0 : i32
    return %c0_i32, %c0_i32_0, %c0_i32_1 : i32, i32, i32
  }
  func.func @transform_2(%arg0: i32) -> (i32, i32, i32) {
    %c0_i32 = arith.constant 0 : i32
    %c0_i32_0 = arith.constant 0 : i32
    %c0_i32_1 = arith.constant 0 : i32
    %c0_i32_2 = arith.constant 0 : i32
    return %c0_i32, %c0_i32_0, %c0_i32_1 : i32, i32, i32
  }
  func.func @transform_3(%arg0: i32) -> (i32, i32, i32) {
    %c0_i32 = arith.constant 0 : i32
    %c0_i32_0 = arith.constant 0 : i32
    %c0_i32_1 = arith.constant 0 : i32
    %c0_i32_2 = arith.constant 0 : i32
    return %c0_i32, %c0_i32_0, %c0_i32_1 : i32, i32, i32
  }
  func.func @transform_4(%arg0: i32) -> (i32, i32, i32) {
    %c0_i32 = arith.constant 0 : i32
    %c0_i32_0 = arith.constant 0 : i32
    %c0_i32_1 = arith.constant 0 : i32
    %c0_i32_2 = arith.constant 0 : i32
    return %c0_i32, %c0_i32_0, %c0_i32_1 : i32, i32, i32
  }
  func.func @transform_5(%arg0: i32) -> (i32, i32, i32) {
    %c0_i32 = arith.constant 0 : i32
    %c0_i32_0 = arith.constant 0 : i32
    %c0_i32_1 = arith.constant 0 : i32
    %c0_i32_2 = arith.constant 0 : i32
    return %c0_i32, %c0_i32_0, %c0_i32_1 : i32, i32, i32
  }
  func.func @transform_6(%arg0: i32) -> (i32, i32, i32) {
    %c0_i32 = arith.constant 0 : i32
    %c0_i32_0 = arith.constant 0 : i32
    %c0_i32_1 = arith.constant 0 : i32
    %c0_i32_2 = arith.constant 0 : i32
    return %c0_i32, %c0_i32_0, %c0_i32_1 : i32, i32, i32
  }
  func.func @transform_7(%arg0: i32) -> (i32, i32) {
    %c0_i32 = arith.constant 0 : i32
    %c0_i32_0 = arith.constant 0 : i32
    return %arg0, %c0_i32 : i32, i32
  }
  func.func @transform_8(%arg0: i32) -> (i32, i32) {
    %c0_i32 = arith.constant 0 : i32
    %c0_i32_0 = arith.constant 0 : i32
    return %arg0, %c0_i32 : i32, i32
  }
}

</mosaic_0001>

<llo_original>
// kernel: tpu_custom_call.1
$region0: #{tpu_custom_call.1}
  #allocation0 [shape = 'u32[]', space=smem, size = 0x4, offset = 0x4, fixed_abs, tag = 'smem constant byte address 0x4 - core index']
  #allocation1 [shape = 'u32[72,128]{1,0:T(1,128)}', space=vmem, size = 0x9000, scoped, tag = 'internal scratch']
  %s0 = inlined_call_operand.hbm [shape: f32[16,128], index: 0, kind: input, shape index: {}]
  %s1 = inlined_call_operand.hbm [shape: f32[6,128,128], index: 1, kind: input, shape index: {}]
  %s2 = inlined_call_operand.hbm [shape: f32[6,1,128], index: 2, kind: input, shape index: {}]
  %s3 = inlined_call_operand.hbm [shape: f32[6,128,128], index: 3, kind: input, shape index: {}]
  %s4 = inlined_call_operand.hbm [shape: f32[6,1,128], index: 4, kind: input, shape index: {}]
  %s5 = inlined_call_operand.hbm [shape: f32[6,128,256], index: 5, kind: input, shape index: {}]
  %s6 = inlined_call_operand.hbm [shape: f32[6,1,256], index: 6, kind: input, shape index: {}]
  %s7 = inlined_call_operand.hbm [shape: f32[16,128], index: 7, kind: output, shape index: {0}]
  %s8 = inlined_call_operand.vmem [shape: f32[16,8], index: 8, kind: output, shape index: {1}]
  %9 = xla_tuple %s7, %s8
  %s10 = sld [smem:[#allocation0]]
  $region74: #{tpu_custom_call.1} parent=0
    _
  %s12 = ssub.s32 1, %s10
  %s13 = scalar_select 0, %s12, %s10
  $region1: #{tpu_custom_call.1} parent=0
    #allocation2 [shape = 'u8[8192]{0}', space=vmem, size = 0x2000, scoped, tag = 'input window, operand 0, single buffered']
    #allocation3 [shape = 's32[1]{0}', space=sflag, size = 0x4, scoped, tag = 'scoped memory for tpu_custom_call.1']
    #allocation4 [shape = 's32[1]{0}', space=sflag, size = 0x4, scoped, tag = 'scoped memory for tpu_custom_call.1']
    #allocation5 [shape = 'u8[393216]{0}', space=vmem, size = 0x60000, scoped, tag = 'input window, operand 1, single buffered']
    #allocation6 [shape = 's32[1]{0}', space=sflag, size = 0x4, scoped, tag = 'scoped memory for tpu_custom_call.1']
    #allocation7 [shape = 'u8[3072]{0}', space=vmem, size = 0xc00, scoped, tag = 'input window, operand 2, single buffered']
    #allocation8 [shape = 'u8[393216]{0}', space=vmem, size = 0x60000, scoped, tag = 'input window, operand 3, single buffered']
    #allocation9 [shape = 's32[1]{0}', space=sflag, size = 0x4, scoped, tag = 'scoped memory for tpu_custom_call.1']
    #allocation10 [shape = 'u8[3072]{0}', space=vmem, size = 0xc00, scoped, tag = 'input window, operand 4, single buffered']
    #allocation11 [shape = 'u8[786432]{0}', space=vmem, size = 0xc0000, scoped, tag = 'input window, operand 5, single buffered']
    #allocation12 [shape = 's32[1]{0}', space=sflag, size = 0x4, scoped, tag = 'scoped memory for tpu_custom_call.1']
    #allocation13 [shape = 'u8[6144]{0}', space=vmem, size = 0x1800, scoped, tag = 'input window, operand 6, single buffered']
    #allocation14 [shape = 'u8[8192]{0}', space=vmem, size = 0x2000, scoped, tag = 'output window, operand 0, single buffered']
    %14 = vsyncpa [#allocation3], 0
    %15 = vsyncpa [#allocation6], 0
    %16 = vsyncpa [#allocation9], 0
    %17 = vsyncpa [#allocation12], 0
    %18 = vsyncpa [#allocation4], 0
    // Predicated region
    $region2: #{tpu_custom_call.1} parent=1 // pred_check
      _
    $region3: #{tpu_custom_call.1} parent=1 // pred_check_branch
      %20 = sbr.rel (0) target = $region5
    $region4: #{tpu_custom_call.1} parent=1 // pred_region
      %22 = vsyncadd [#allocation3], 0
      %s23 = sshll.u32 %s0, 4
      %s24 = int_to_ptr.hbm [resolvable:$true] %s23
      %s25 = sshll.u32 [#allocation2], 4
      %s26 = int_to_ptr.vmem [resolvable:$true] %s25
      %31 = dma.hbm_to_vmem [thread:$0]  %s24, 256, %s26, [#allocation3], 128, 128, 8
    $region5: #{tpu_custom_call.1} parent=1 // pred_fallthru
      _
    // Predicated region
    $region6: #{tpu_custom_call.1} parent=1 // pred_check
      _
    $region7: #{tpu_custom_call.1} parent=1 // pred_check_branch
      %33 = sbr.rel (0) target = $region9
    $region8: #{tpu_custom_call.1} parent=1 // pred_region
      %35 = vsyncadd [#allocation6], 0
      %s36 = sshll.u32 %s1, 4
      %s37 = int_to_ptr.hbm [resolvable:$true] %s36
      %s38 = sshll.u32 [#allocation5], 4
      %s39 = int_to_ptr.vmem [resolvable:$true] %s38
      %44 = dma.hbm_to_vmem [thread:$0]  %s37, 12288, %s39, [#allocation6], 128, 128, 8
    $region9: #{tpu_custom_call.1} parent=1 // pred_fallthru
      _
    // Predicated region
    $region10: #{tpu_custom_call.1} parent=1 // pred_check
      _
    $region11: #{tpu_custom_call.1} parent=1 // pred_check_branch
      %46 = sbr.rel (0) target = $region13
    $region12: #{tpu_custom_call.1} parent=1 // pred_region
      %48 = vsyncadd [#allocation6], 0
      %s49 = sshll.u32 %s2, 4
      %s50 = int_to_ptr.hbm [resolvable:$true] %s49
      %s51 = sshll.u32 [#allocation7], 4
      %s52 = int_to_ptr.vmem [resolvable:$true] %s51
      %57 = dma.hbm_to_vmem [thread:$0]  %s50, 96, %s52, [#allocation6], 16, 16, 1
    $region13: #{tpu_custom_call.1} parent=1 // pred_fallthru
      _
    // Predicated region
    $region14: #{tpu_custom_call.1} parent=1 // pred_check
      _
    $region15: #{tpu_custom_call.1} parent=1 // pred_check_branch
      %59 = sbr.rel (0) target = $region17
    $region16: #{tpu_custom_call.1} parent=1 // pred_region
      %61 = vsyncadd [#allocation9], 0
      %s62 = sshll.u32 %s3, 4
      %s63 = int_to_ptr.hbm [resolvable:$true] %s62
      %s64 = sshll.u32 [#allocation8], 4
      %s65 = int_to_ptr.vmem [resolvable:$true] %s64
      %70 = dma.hbm_to_vmem [thread:$0]  %s63, 12288, %s65, [#allocation9], 128, 128, 8
    $region17: #{tpu_custom_call.1} parent=1 // pred_fallthru
      _
    // Predicated region
    $region18: #{tpu_custom_call.1} parent=1 // pred_check
      _
    $region19: #{tpu_custom_call.1} parent=1 // pred_check_branch
      %72 = sbr.rel (0) target = $region21
    $region20: #{tpu_custom_call.1} parent=1 // pred_region
      %74 = vsyncadd [#allocation9], 0
      %s75 = sshll.u32 %s4, 4
      %s76 = int_to_ptr.hbm [resolvable:$true] %s75
      %s77 = sshll.u32 [#allocation10], 4
      %s78 = int_to_ptr.vmem [resolvable:$true] %s77
      %83 = dma.hbm_to_vmem [thread:$0]  %s76, 96, %s78, [#allocation9], 16, 16, 1
    $region21: #{tpu_custom_call.1} parent=1 // pred_fallthru
      _
    // Predicated region
    $region22: #{tpu_custom_call.1} parent=1 // pred_check
      _
    $region23: #{tpu_custom_call.1} parent=1 // pred_check_branch
      %85 = sbr.rel (0) target = $region25
    $region24: #{tpu_custom_call.1} parent=1 // pred_region
      %87 = vsyncadd [#allocation12], 0
      %s88 = sshll.u32 %s5, 4
      %s89 = int_to_ptr.hbm [resolvable:$true] %s88
      %s90 = sshll.u32 [#allocation11], 4
      %s91 = int_to_ptr.vmem [resolvable:$true] %s90
      %96 = dma.hbm_to_vmem [thread:$0]  %s89, 24576, %s91, [#allocation12], 256, 256, 16
    $region25: #{tpu_custom_call.1} parent=1 // pred_fallthru
      _
    // Predicated region
    $region26: #{tpu_custom_call.1} parent=1 // pred_check
      _
    $region27: #{tpu_custom_call.1} parent=1 // pred_check_branch
      %98 = sbr.rel (0) target = $region29
    $region28: #{tpu_custom_call.1} parent=1 // pred_region
      %100 = vsyncadd [#allocation12], 0
      %s101 = sshll.u32 %s6, 4
      %s102 = int_to_ptr.hbm [resolvable:$true] %s101
      %s103 = sshll.u32 [#allocation13], 4
      %s104 = int_to_ptr.vmem [resolvable:$true] %s103
      %109 = dma.hbm_to_vmem [thread:$0]  %s102, 192, %s104, [#allocation12], 32, 32, 2
    $region29: #{tpu_custom_call.1} parent=1 // pred_fallthru
      _
    // Predicated region
    $region30: #{tpu_custom_call.1} parent=1 // pred_check
      _
    $region31: #{tpu_custom_call.1} parent=1 // pred_check_branch
      %111 = sbr.rel (0) target = $region33
    $region32: #{tpu_custom_call.1} parent=1 // pred_region
      %113 = dma.done [#allocation3], 256
    $region33: #{tpu_custom_call.1} parent=1 // pred_fallthru
      _
    // Predicated region
    $region34: #{tpu_custom_call.1} parent=1 // pred_check
      _
    $region35: #{tpu_custom_call.1} parent=1 // pred_check_branch
      %115 = sbr.rel (0) target = $region37
    $region36: #{tpu_custom_call.1} parent=1 // pred_region
      %117 = dma.done [#allocation6], 12288
    $region37: #{tpu_custom_call.1} parent=1 // pred_fallthru
      _
    // Predicated region
    $region38: #{tpu_custom_call.1} parent=1 // pred_check
      _
    $region39: #{tpu_custom_call.1} parent=1 // pred_check_branch
      %119 = sbr.rel (0) target = $region41
    $region40: #{tpu_custom_call.1} parent=1 // pred_region
      %121 = dma.done [#allocation6], 96
    $region41: #{tpu_custom_call.1} parent=1 // pred_fallthru
      _
    // Predicated region
    $region42: #{tpu_custom_call.1} parent=1 // pred_check
      _
    $region43: #{tpu_custom_call.1} parent=1 // pred_check_branch
      %123 = sbr.rel (0) target = $region45
    $region44: #{tpu_custom_call.1} parent=1 // pred_region
      %125 = dma.done [#allocation9], 12288
    $region45: #{tpu_custom_call.1} parent=1 // pred_fallthru
      _
    // Predicated region
    $region46: #{tpu_custom_call.1} parent=1 // pred_check
      _
    $region47: #{tpu_custom_call.1} parent=1 // pred_check_branch
      %127 = sbr.rel (0) target = $region49
    $region48: #{tpu_custom_call.1} parent=1 // pred_region
      %129 = dma.done [#allocation9], 96
    $region49: #{tpu_custom_call.1} parent=1 // pred_fallthru
      _
    // Predicated region
    $region50: #{tpu_custom_call.1} parent=1 // pred_check
      _
    $region51: #{tpu_custom_call.1} parent=1 // pred_check_branch
      %131 = sbr.rel (0) target = $region53
    $region52: #{tpu_custom_call.1} parent=1 // pred_region
      %133 = dma.done [#allocation12], 24576
    $region53: #{tpu_custom_call.1} parent=1 // pred_fallthru
      _
    // Predicated region
    $region54: #{tpu_custom_call.1} parent=1 // pred_check
      _
    $region55: #{tpu_custom_call.1} parent=1 // pred_check_branch
      %135 = sbr.rel (0) target = $region57
    $region56: #{tpu_custom_call.1} parent=1 // pred_region
      %137 = dma.done [#allocation12], 192
    $region57: #{tpu_custom_call.1} parent=1 // pred_fallthru
      _
    %v138 = vld [vmem:[#allocation2] sm:$0xff]
    %v139 = vld [vmem:[#allocation2 + $0x8] sm:$0xff]
    %v140 = vld [vmem:[#allocation5] sm:$0xff]
    %v141 = vld [vmem:[#allocation5 + $0x8] sm:$0xff]
    %v142 = vld [vmem:[#allocation5 + $0x10] sm:$0xff]
    %v143 = vld [vmem:[#allocation5 + $0x18] sm:$0xff]
    %v144 = vld [vmem:[#allocation5 + $0x20] sm:$0xff]
    %v145 = vld [vmem:[#allocation5 + $0x28] sm:$0xff]
    %v146 = vld [vmem:[#allocation5 + $0x30] sm:$0xff]
    %v147 = vld [vmem:[#allocation5 + $0x38] sm:$0xff]
    %v148 = vld [vmem:[#allocation5 + $0x40] sm:$0xff]
    %v149 = vld [vmem:[#allocation5 + $0x48] sm:$0xff]
    %v150 = vld [vmem:[#allocation5 + $0x50] sm:$0xff]
    %v151 = vld [vmem:[#allocation5 + $0x58] sm:$0xff]
    %v152 = vld [vmem:[#allocation5 + $0x60] sm:$0xff]
    %v153 = vld [vmem:[#allocation5 + $0x68] sm:$0xff]
    %v154 = vld [vmem:[#allocation5 + $0x70] sm:$0xff]
    %v155 = vld [vmem:[#allocation5 + $0x78] sm:$0xff]
    %v156 = vld [vmem:[#allocation7] sm:$0x1]
    %v158 = vperm.slane %v156, 0
    %160 = vmatpush.msra.mxu0 %v155
    %161 = vmatpush.msra.mxu0 %v154
    %162 = vmatpush.msra.mxu0 %v153
    %163 = vmatpush.msra.mxu0 %v152
    %164 = vmatpush.msra.mxu0 %v151
    %165 = vmatpush.msra.mxu0 %v150
    %166 = vmatpush.msra.mxu0 %v149
    %167 = vmatpush.msra.mxu0 %v148
    %168 = vmatpush.msra.mxu0 %v147
    %169 = vmatpush.msra.mxu0 %v146
    %170 = vmatpush.msra.mxu0 %v145
    %171 = vmatpush.msra.mxu0 %v144
    %172 = vmatpush.msra.mxu0 %v143
    %173 = vmatpush.msra.mxu0 %v142
    %174 = vmatpush.msra.mxu0 %v141
    %175 = vmatpush.msra.mxu0 %v140
    %176 = vmatmul.f32.gmra.mxu0 %v138
    %v177 = vpop.f32.mrf.mxu0
    %v178 = vadd.f32 %v158, %v177
    %179 = vmatmul.f32.gmra.mxu0 %v139
    %v180 = vpop.f32.mrf.mxu0
    %v181 = vadd.f32 %v158, %v180
    %182 = vdwg.mxu0
    %v183 = vmax.f32 %v178, 0.0
    %v184 = vmax.f32 %v181, 0.0
    %v185 = vld [vmem:[#allocation8] sm:$0xff]
    %v186 = vld [vmem:[#allocation8 + $0x8] sm:$0xff]
    %v187 = vld [vmem:[#allocation8 + $0x10] sm:$0xff]
    %v188 = vld [vmem:[#allocation8 + $0x18] sm:$0xff]
    %v189 = vld [vmem:[#allocation8 + $0x20] sm:$0xff]
    %v190 = vld [vmem:[#allocation8 + $0x28] sm:$0xff]
    %v191 = vld [vmem:[#allocation8 + $0x30] sm:$0xff]
    %v192 = vld [vmem:[#allocation8 + $0x38] sm:$0xff]
    %v193 = vld [vmem:[#allocation8 + $0x40] sm:$0xff]
    %v194 = vld [vmem:[#allocation8 + $0x48] sm:$0xff]
    %v195 = vld [vmem:[#allocation8 + $0x50] sm:$0xff]
    %v196 = vld [vmem:[#allocation8 + $0x58] sm:$0xff]
    %v197 = vld [vmem:[#allocation8 + $0x60] sm:$0xff]
    %v198 = vld [vmem:[#allocation8 + $0x68] sm:$0xff]
    %v199 = vld [vmem:[#allocation8 + $0x70] sm:$0xff]
    %v200 = vld [vmem:[#allocation8 + $0x78] sm:$0xff]
    %v201 = vld [vmem:[#allocation10] sm:$0x1]
    %v203 = vperm.slane %v201, 0
    %205 = vmatpush.msra.mxu0 %v200
    %206 = vmatpush.msra.mxu0 %v199
    %207 = vmatpush.msra.mxu0 %v198
    %208 = vmatpush.msra.mxu0 %v197
    %209 = vmatpush.msra.mxu0 %v196
    %210 = vmatpush.msra.mxu0 %v195
    %211 = vmatpush.msra.mxu0 %v194
    %212 = vmatpush.msra.mxu0 %v193
    %213 = vmatpush.msra.mxu0 %v192
    %214 = vmatpush.msra.mxu0 %v191
    %215 = vmatpush.msra.mxu0 %v190
    %216 = vmatpush.msra.mxu0 %v189
    %217 = vmatpush.msra.mxu0 %v188
    %218 = vmatpush.msra.mxu0 %v187
    %219 = vmatpush.msra.mxu0 %v186
    %220 = vmatpush.msra.mxu0 %v185
    %221 = vmatmul.f32.gmra.mxu0 %v183
    %v222 = vpop.f32.mrf.mxu0
    %v223 = vadd.f32 %v203, %v222
    %224 = vmatmul.f32.gmra.mxu0 %v184
    %v225 = vpop.f32.mrf.mxu0
    %v226 = vadd.f32 %v203, %v225
    %227 = vdwg.mxu0
    %v228 = vmax.f32 %v223, 0.0
    %v229 = vmax.f32 %v226, 0.0
    %v230 = vld [vmem:[#allocation11] sm:$0xff]
    %v231 = vld [vmem:[#allocation11 + $0x8] sm:$0xff]
    %v232 = vld [vmem:[#allocation11 + $0x10] sm:$0xff]
    %v233 = vld [vmem:[#allocation11 + $0x18] sm:$0xff]
    %v234 = vld [vmem:[#allocation11 + $0x20] sm:$0xff]
    %v235 = vld [vmem:[#allocation11 + $0x28] sm:$0xff]
    %v236 = vld [vmem:[#allocation11 + $0x30] sm:$0xff]
    %v237 = vld [vmem:[#allocation11 + $0x38] sm:$0xff]
    %v238 = vld [vmem:[#allocation11 + $0x40] sm:$0xff]
    %v239 = vld [vmem:[#allocation11 + $0x48] sm:$0xff]
    %v240 = vld [vmem:[#allocation11 + $0x50] sm:$0xff]
    %v241 = vld [vmem:[#allocation11 + $0x58] sm:$0xff]
    %v242 = vld [vmem:[#allocation11 + $0x60] sm:$0xff]
    %v243 = vld [vmem:[#allocation11 + $0x68] sm:$0xff]
    %v244 = vld [vmem:[#allocation11 + $0x70] sm:$0xff]
    %v245 = vld [vmem:[#allocation11 + $0x78] sm:$0xff]
    %v246 = vld [vmem:[#allocation11 + $0x80] sm:$0xff]
    %v247 = vld [vmem:[#allocation11 + $0x88] sm:$0xff]
    %v248 = vld [vmem:[#allocation11 + $0x90] sm:$0xff]
    %v249 = vld [vmem:[#allocation11 + $0x98] sm:$0xff]
    %v250 = vld [vmem:[#allocation11 + $0xa0] sm:$0xff]
    %v251 = vld [vmem:[#allocation11 + $0xa8] sm:$0xff]
    %v252 = vld [vmem:[#allocation11 + $0xb0] sm:$0xff]
    %v253 = vld [vmem:[#allocation11 + $0xb8] sm:$0xff]
    %v254 = vld [vmem:[#allocation11 + $0xc0] sm:$0xff]
    %v255 = vld [vmem:[#allocation11 + $0xc8] sm:$0xff]
    %v256 = vld [vmem:[#allocation11 + $0xd0] sm:$0xff]
    %v257 = vld [vmem:[#allocation11 + $0xd8] sm:$0xff]
    %v258 = vld [vmem:[#allocation11 + $0xe0] sm:$0xff]
    %v259 = vld [vmem:[#allocation11 + $0xe8] sm:$0xff]
    %v260 = vld [vmem:[#allocation11 + $0xf0] sm:$0xff]
    %v261 = vld [vmem:[#allocation11 + $0xf8] sm:$0xff]
    %v262 = vld [vmem:[#allocation13] sm:$0x3]
    %v264 = vperm.slane %v262, 0
    %v265 = vperm.slane %v262, 1
    %268 = vmatpush.msra.mxu0 %v260
    %269 = vmatpush.msra.mxu0 %v258
    %270 = vmatpush.msra.mxu0 %v256
    %271 = vmatpush.msra.mxu0 %v254
    %272 = vmatpush.msra.mxu0 %v252
    %273 = vmatpush.msra.mxu0 %v250
    %274 = vmatpush.msra.mxu0 %v248
    %275 = vmatpush.msra.mxu0 %v246
    %276 = vmatpush.msra.mxu0 %v244
    %277 = vmatpush.msra.mxu0 %v242
    %278 = vmatpush.msra.mxu0 %v240
    %279 = vmatpush.msra.mxu0 %v238
    %280 = vmatpush.msra.mxu0 %v236
    %281 = vmatpush.msra.mxu0 %v234
    %282 = vmatpush.msra.mxu0 %v232
    %283 = vmatpush.msra.mxu0 %v230
    %284 = vmatmul.f32.gmra.mxu0 %v228
    %v285 = vpop.f32.mrf.mxu0
    %v286 = vadd.f32 %v264, %v285
    %287 = vmatmul.f32.gmra.mxu0 %v229
    %v288 = vpop.f32.mrf.mxu0
    %v289 = vadd.f32 %v264, %v288
    %290 = vdwg.mxu0
    %291 = vmatpush.msra.mxu0 %v261
    %292 = vmatpush.msra.mxu0 %v259
    %293 = vmatpush.msra.mxu0 %v257
    %294 = vmatpush.msra.mxu0 %v255
    %295 = vmatpush.msra.mxu0 %v253
    %296 = vmatpush.msra.mxu0 %v251
    %297 = vmatpush.msra.mxu0 %v249
    %298 = vmatpush.msra.mxu0 %v247
    %299 = vmatpush.msra.mxu0 %v245
    %300 = vmatpush.msra.mxu0 %v243
    %301 = vmatpush.msra.mxu0 %v241
    %302 = vmatpush.msra.mxu0 %v239
    %303 = vmatpush.msra.mxu0 %v237
    %304 = vmatpush.msra.mxu0 %v235
    %305 = vmatpush.msra.mxu0 %v233
    %306 = vmatpush.msra.mxu0 %v231
    %307 = vmatmul.f32.gmra.mxu0 %v228
    %v308 = vpop.f32.mrf.mxu0
    %v309 = vadd.f32 %v265, %v308
    %310 = vmatmul.f32.gmra.mxu0 %v229
    %v311 = vpop.f32.mrf.mxu0
    %v312 = vadd.f32 %v265, %v311
    %313 = vdwg.mxu0
    %v314 = vtanh.pop %v286
    %v315 = vtanh.pop %v289
    %v316 = vmul.f32 %v314, 1.442695
    %v317 = vpow.pop %v316
    %v318 = vmul.f32 %v315, 1.442695
    %v319 = vpow.pop %v318
    %v320 = vmul.f32 %v138, %v317
    %v321 = vmul.f32 %v139, %v319
    %v322 = vadd.f32 %v320, %v309
    %v323 = vadd.f32 %v321, %v312
    %324 = vadd.xlane.f32.xlu0 %v314
    %v325 = vpop.xlane.xlu0 %324
    %326 = vadd.xlane.f32.xlu0 %v315
    %v327 = vpop.xlane.xlu0 %326
    %v328 = vadd.f32 %v325, 0.0
    %v329 = vadd.f32 %v327, 0.0
    %s330 = scalar_lea.vmem [#allocation5], 128
    %v331 = vld [vmem:[%s330] sm:$0xff]
    %v332 = vld [vmem:[%s330 + $0x8] sm:$0xff]
    %v333 = vld [vmem:[%s330 + $0x10] sm:$0xff]
    %v334 = vld [vmem:[%s330 + $0x18] sm:$0xff]
    %v335 = vld [vmem:[%s330 + $0x20] sm:$0xff]
    %v336 = vld [vmem:[%s330 + $0x28] sm:$0xff]
    %v337 = vld [vmem:[%s330 + $0x30] sm:$0xff]
    %v338 = vld [vmem:[%s330 + $0x38] sm:$0xff]
    %v339 = vld [vmem:[%s330 + $0x40] sm:$0xff]
    %v340 = vld [vmem:[%s330 + $0x48] sm:$0xff]
    %v341 = vld [vmem:[%s330 + $0x50] sm:$0xff]
    %v342 = vld [vmem:[%s330 + $0x58] sm:$0xff]
    %v343 = vld [vmem:[%s330 + $0x60] sm:$0xff]
    %v344 = vld [vmem:[%s330 + $0x68] sm:$0xff]
    %v345 = vld [vmem:[%s330 + $0x70] sm:$0xff]
    %v346 = vld [vmem:[%s330 + $0x78] sm:$0xff]
    %s347 = scalar_lea.vmem [#allocation7], 1
    %v348 = vld [vmem:[%s347] sm:$0x1]
    %v350 = vperm.slane %v348, 0
    %352 = vmatpush.msra.mxu0 %v346
    %353 = vmatpush.msra.mxu0 %v345
    %354 = vmatpush.msra.mxu0 %v344
    %355 = vmatpush.msra.mxu0 %v343
    %356 = vmatpush.msra.mxu0 %v342
    %357 = vmatpush.msra.mxu0 %v341
    %358 = vmatpush.msra.mxu0 %v340
    %359 = vmatpush.msra.mxu0 %v339
    %360 = vmatpush.msra.mxu0 %v338
    %361 = vmatpush.msra.mxu0 %v337
    %362 = vmatpush.msra.mxu0 %v336
    %363 = vmatpush.msra.mxu0 %v335
    %364 = vmatpush.msra.mxu0 %v334
    %365 = vmatpush.msra.mxu0 %v333
    %366 = vmatpush.msra.mxu0 %v332
    %367 = vmatpush.msra.mxu0 %v331
    %368 = vmatmul.f32.gmra.mxu0 %v322
    %v369 = vpop.f32.mrf.mxu0
    %v370 = vadd.f32 %v350, %v369
    %371 = vmatmul.f32.gmra.mxu0 %v323
    %v372 = vpop.f32.mrf.mxu0
    %v373 = vadd.f32 %v350, %v372
    %374 = vdwg.mxu0
    %v375 = vmax.f32 %v370, 0.0
    %v376 = vmax.f32 %v373, 0.0
    %s377 = scalar_lea.vmem [#allocation8], 128
    %v378 = vld [vmem:[%s377] sm:$0xff]
    %v379 = vld [vmem:[%s377 + $0x8] sm:$0xff]
    %v380 = vld [vmem:[%s377 + $0x10] sm:$0xff]
    %v381 = vld [vmem:[%s377 + $0x18] sm:$0xff]
    %v382 = vld [vmem:[%s377 + $0x20] sm:$0xff]
    %v383 = vld [vmem:[%s377 + $0x28] sm:$0xff]
    %v384 = vld [vmem:[%s377 + $0x30] sm:$0xff]
    %v385 = vld [vmem:[%s377 + $0x38] sm:$0xff]
    %v386 = vld [vmem:[%s377 + $0x40] sm:$0xff]
    %v387 = vld [vmem:[%s377 + $0x48] sm:$0xff]
    %v388 = vld [vmem:[%s377 + $0x50] sm:$0xff]
    %v389 = vld [vmem:[%s377 + $0x58] sm:$0xff]
    %v390 = vld [vmem:[%s377 + $0x60] sm:$0xff]
    %v391 = vld [vmem:[%s377 + $0x68] sm:$0xff]
    %v392 = vld [vmem:[%s377 + $0x70] sm:$0xff]
    %v393 = vld [vmem:[%s377 + $0x78] sm:$0xff]
    %s394 = scalar_lea.vmem [#allocation10], 1
    %v395 = vld [vmem:[%s394] sm:$0x1]
    %v397 = vperm.slane %v395, 0
    %399 = vmatpush.msra.mxu0 %v393
    %400 = vmatpush.msra.mxu0 %v392
    %401 = vmatpush.msra.mxu0 %v391
    %402 = vmatpush.msra.mxu0 %v390
    %403 = vmatpush.msra.mxu0 %v389
    %404 = vmatpush.msra.mxu0 %v388
    %405 = vmatpush.msra.mxu0 %v387
    %406 = vmatpush.msra.mxu0 %v386
    %407 = vmatpush.msra.mxu0 %v385
    %408 = vmatpush.msra.mxu0 %v384
    %409 = vmatpush.msra.mxu0 %v383
    %410 = vmatpush.msra.mxu0 %v382
    %411 = vmatpush.msra.mxu0 %v381
    %412 = vmatpush.msra.mxu0 %v380
    %413 = vmatpush.msra.mxu0 %v379
    %414 = vmatpush.msra.mxu0 %v378
    %415 = vmatmul.f32.gmra.mxu0 %v375
    %v416 = vpop.f32.mrf.mxu0
    %v417 = vadd.f32 %v397, %v416
    %418 = vmatmul.f32.gmra.mxu0 %v376
    %v419 = vpop.f32.mrf.mxu0
    %v420 = vadd.f32 %v397, %v419
    %421 = vdwg.mxu0
    %v422 = vmax.f32 %v417, 0.0
    %v423 = vmax.f32 %v420, 0.0
    %s424 = scalar_lea.vmem [#allocation11], 256
    %v425 = vld [vmem:[%s424] sm:$0xff]
    %v426 = vld [vmem:[%s424 + $0x8] sm:$0xff]
    %v427 = vld [vmem:[%s424 + $0x10] sm:$0xff]
    %v428 = vld [vmem:[%s424 + $0x18] sm:$0xff]
    %v429 = vld [vmem:[%s424 + $0x20] sm:$0xff]
    %v430 = vld [vmem:[%s424 + $0x28] sm:$0xff]
    %v431 = vld [vmem:[%s424 + $0x30] sm:$0xff]
    %v432 = vld [vmem:[%s424 + $0x38] sm:$0xff]
    %v433 = vld [vmem:[%s424 + $0x40] sm:$0xff]
    %v434 = vld [vmem:[%s424 + $0x48] sm:$0xff]
    %v435 = vld [vmem:[%s424 + $0x50] sm:$0xff]
    %v436 = vld [vmem:[%s424 + $0x58] sm:$0xff]
    %v437 = vld [vmem:[%s424 + $0x60] sm:$0xff]
    %v438 = vld [vmem:[%s424 + $0x68] sm:$0xff]
    %v439 = vld [vmem:[%s424 + $0x70] sm:$0xff]
    %v440 = vld [vmem:[%s424 + $0x78] sm:$0xff]
    %v441 = vld [vmem:[%s424 + $0x80] sm:$0xff]
    %v442 = vld [vmem:[%s424 + $0x88] sm:$0xff]
    %v443 = vld [vmem:[%s424 + $0x90] sm:$0xff]
    %v444 = vld [vmem:[%s424 + $0x98] sm:$0xff]
    %v445 = vld [vmem:[%s424 + $0xa0] sm:$0xff]
    %v446 = vld [vmem:[%s424 + $0xa8] sm:$0xff]
    %v447 = vld [vmem:[%s424 + $0xb0] sm:$0xff]
    %v448 = vld [vmem:[%s424 + $0xb8] sm:$0xff]
    %v449 = vld [vmem:[%s424 + $0xc0] sm:$0xff]
    %v450 = vld [vmem:[%s424 + $0xc8] sm:$0xff]
    %v451 = vld [vmem:[%s424 + $0xd0] sm:$0xff]
    %v452 = vld [vmem:[%s424 + $0xd8] sm:$0xff]
    %v453 = vld [vmem:[%s424 + $0xe0] sm:$0xff]
    %v454 = vld [vmem:[%s424 + $0xe8] sm:$0xff]
    %v455 = vld [vmem:[%s424 + $0xf0] sm:$0xff]
    %v456 = vld [vmem:[%s424 + $0xf8] sm:$0xff]
    %s457 = scalar_lea.vmem [#allocation13], 2
    %v458 = vld [vmem:[%s457] sm:$0x3]
    %v460 = vperm.slane %v458, 0
    %v461 = vperm.slane %v458, 1
    %464 = vmatpush.msra.mxu0 %v455
    %465 = vmatpush.msra.mxu0 %v453
    %466 = vmatpush.msra.mxu0 %v451
    %467 = vmatpush.msra.mxu0 %v449
    %468 = vmatpush.msra.mxu0 %v447
    %469 = vmatpush.msra.mxu0 %v445
    %470 = vmatpush.msra.mxu0 %v443
    %471 = vmatpush.msra.mxu0 %v441
    %472 = vmatpush.msra.mxu0 %v439
    %473 = vmatpush.msra.mxu0 %v437
    %474 = vmatpush.msra.mxu0 %v435
    %475 = vmatpush.msra.mxu0 %v433
    %476 = vmatpush.msra.mxu0 %v431
    %477 = vmatpush.msra.mxu0 %v429
    %478 = vmatpush.msra.mxu0 %v427
    %479 = vmatpush.msra.mxu0 %v425
    %480 = vmatmul.f32.gmra.mxu0 %v422
    %v481 = vpop.f32.mrf.mxu0
    %v482 = vadd.f32 %v460, %v481
    %483 = vmatmul.f32.gmra.mxu0 %v423
    %v484 = vpop.f32.mrf.mxu0
    %v485 = vadd.f32 %v460, %v484
    %486 = vdwg.mxu0
    %487 = vmatpush.msra.mxu0 %v456
    %488 = vmatpush.msra.mxu0 %v454
    %489 = vmatpush.msra.mxu0 %v452
    %490 = vmatpush.msra.mxu0 %v450
    %491 = vmatpush.msra.mxu0 %v448
    %492 = vmatpush.msra.mxu0 %v446
    %493 = vmatpush.msra.mxu0 %v444
    %494 = vmatpush.msra.mxu0 %v442
    %495 = vmatpush.msra.mxu0 %v440
    %496 = vmatpush.msra.mxu0 %v438
    %497 = vmatpush.msra.mxu0 %v436
    %498 = vmatpush.msra.mxu0 %v434
    %499 = vmatpush.msra.mxu0 %v432
    %500 = vmatpush.msra.mxu0 %v430
    %501 = vmatpush.msra.mxu0 %v428
    %502 = vmatpush.msra.mxu0 %v426
    %503 = vmatmul.f32.gmra.mxu0 %v422
    %v504 = vpop.f32.mrf.mxu0
    %v505 = vadd.f32 %v461, %v504
    %506 = vmatmul.f32.gmra.mxu0 %v423
    %v507 = vpop.f32.mrf.mxu0
    %v508 = vadd.f32 %v461, %v507
    %509 = vdwg.mxu0
    %v510 = vtanh.pop %v482
    %v511 = vtanh.pop %v485
    %v512 = vmul.f32 %v510, 1.442695
    %v513 = vpow.pop %v512
    %v514 = vmul.f32 %v511, 1.442695
    %v515 = vpow.pop %v514
    %v516 = vmul.f32 %v322, %v513
    %v517 = vmul.f32 %v323, %v515
    %v518 = vadd.f32 %v516, %v505
    %v519 = vadd.f32 %v517, %v508
    %520 = vadd.xlane.f32.xlu0 %v510
    %v521 = vpop.xlane.xlu0 %520
    %522 = vadd.xlane.f32.xlu0 %v511
    %v523 = vpop.xlane.xlu0 %522
    %v524 = vadd.f32 %v328, %v521
    %v525 = vadd.f32 %v329, %v523
    %s526 = scalar_lea.vmem [#allocation5], 256
    %v527 = vld [vmem:[%s526] sm:$0xff]
    %v528 = vld [vmem:[%s526 + $0x8] sm:$0xff]
    %v529 = vld [vmem:[%s526 + $0x10] sm:$0xff]
    %v530 = vld [vmem:[%s526 + $0x18] sm:$0xff]
    %v531 = vld [vmem:[%s526 + $0x20] sm:$0xff]
    %v532 = vld [vmem:[%s526 + $0x28] sm:$0xff]
    %v533 = vld [vmem:[%s526 + $0x30] sm:$0xff]
    %v534 = vld [vmem:[%s526 + $0x38] sm:$0xff]
    %v535 = vld [vmem:[%s526 + $0x40] sm:$0xff]
    %v536 = vld [vmem:[%s526 + $0x48] sm:$0xff]
    %v537 = vld [vmem:[%s526 + $0x50] sm:$0xff]
    %v538 = vld [vmem:[%s526 + $0x58] sm:$0xff]
    %v539 = vld [vmem:[%s526 + $0x60] sm:$0xff]
    %v540 = vld [vmem:[%s526 + $0x68] sm:$0xff]
    %v541 = vld [vmem:[%s526 + $0x70] sm:$0xff]
    %v542 = vld [vmem:[%s526 + $0x78] sm:$0xff]
    %s543 = scalar_lea.vmem [#allocation7], 2
    %v544 = vld [vmem:[%s543] sm:$0x1]
    %v546 = vperm.slane %v544, 0
    %548 = vmatpush.msra.mxu0 %v542
    %549 = vmatpush.msra.mxu0 %v541
    %550 = vmatpush.msra.mxu0 %v540
    %551 = vmatpush.msra.mxu0 %v539
    %552 = vmatpush.msra.mxu0 %v538
    %553 = vmatpush.msra.mxu0 %v537
    %554 = vmatpush.msra.mxu0 %v536
    %555 = vmatpush.msra.mxu0 %v535
    %556 = vmatpush.msra.mxu0 %v534
    %557 = vmatpush.msra.mxu0 %v533
    %558 = vmatpush.msra.mxu0 %v532
    %559 = vmatpush.msra.mxu0 %v531
    %560 = vmatpush.msra.mxu0 %v530
    %561 = vmatpush.msra.mxu0 %v529
    %562 = vmatpush.msra.mxu0 %v528
    %563 = vmatpush.msra.mxu0 %v527
    %564 = vmatmul.f32.gmra.mxu0 %v518
    %v565 = vpop.f32.mrf.mxu0
    %v566 = vadd.f32 %v546, %v565
    %567 = vmatmul.f32.gmra.mxu0 %v519
    %v568 = vpop.f32.mrf.mxu0
    %v569 = vadd.f32 %v546, %v568
    %570 = vdwg.mxu0
    %v571 = vmax.f32 %v566, 0.0
    %v572 = vmax.f32 %v569, 0.0
    %s573 = scalar_lea.vmem [#allocation8], 256
    %v574 = vld [vmem:[%s573] sm:$0xff]
    %v575 = vld [vmem:[%s573 + $0x8] sm:$0xff]
    %v576 = vld [vmem:[%s573 + $0x10] sm:$0xff]
    %v577 = vld [vmem:[%s573 + $0x18] sm:$0xff]
    %v578 = vld [vmem:[%s573 + $0x20] sm:$0xff]
    %v579 = vld [vmem:[%s573 + $0x28] sm:$0xff]
    %v580 = vld [vmem:[%s573 + $0x30] sm:$0xff]
    %v581 = vld [vmem:[%s573 + $0x38] sm:$0xff]
    %v582 = vld [vmem:[%s573 + $0x40] sm:$0xff]
    %v583 = vld [vmem:[%s573 + $0x48] sm:$0xff]
    %v584 = vld [vmem:[%s573 + $0x50] sm:$0xff]
    %v585 = vld [vmem:[%s573 + $0x58] sm:$0xff]
    %v586 = vld [vmem:[%s573 + $0x60] sm:$0xff]
    %v587 = vld [vmem:[%s573 + $0x68] sm:$0xff]
    %v588 = vld [vmem:[%s573 + $0x70] sm:$0xff]
    %v589 = vld [vmem:[%s573 + $0x78] sm:$0xff]
    %s590 = scalar_lea.vmem [#allocation10], 2
    %v591 = vld [vmem:[%s590] sm:$0x1]
    %v593 = vperm.slane %v591, 0
    %595 = vmatpush.msra.mxu0 %v589
    %596 = vmatpush.msra.mxu0 %v588
    %597 = vmatpush.msra.mxu0 %v587
    %598 = vmatpush.msra.mxu0 %v586
    %599 = vmatpush.msra.mxu0 %v585
    %600 = vmatpush.msra.mxu0 %v584
    %601 = vmatpush.msra.mxu0 %v583
    %602 = vmatpush.msra.mxu0 %v582
    %603 = vmatpush.msra.mxu0 %v581
    %604 = vmatpush.msra.mxu0 %v580
    %605 = vmatpush.msra.mxu0 %v579
    %606 = vmatpush.msra.mxu0 %v578
    %607 = vmatpush.msra.mxu0 %v577
    %608 = vmatpush.msra.mxu0 %v576
    %609 = vmatpush.msra.mxu0 %v575
    %610 = vmatpush.msra.mxu0 %v574
    %611 = vmatmul.f32.gmra.mxu0 %v571
    %v612 = vpop.f32.mrf.mxu0
    %v613 = vadd.f32 %v593, %v612
    %614 = vmatmul.f32.gmra.mxu0 %v572
    %v615 = vpop.f32.mrf.mxu0
    %v616 = vadd.f32 %v593, %v615
    %617 = vdwg.mxu0
    %v618 = vmax.f32 %v613, 0.0
    %v619 = vmax.f32 %v616, 0.0
    %s620 = scalar_lea.vmem [#allocation11], 512
    %v621 = vld [vmem:[%s620] sm:$0xff]
    %v622 = vld [vmem:[%s620 + $0x8] sm:$0xff]
    %v623 = vld [vmem:[%s620 + $0x10] sm:$0xff]
    %v624 = vld [vmem:[%s620 + $0x18] sm:$0xff]
    %v625 = vld [vmem:[%s620 + $0x20] sm:$0xff]
    %v626 = vld [vmem:[%s620 + $0x28] sm:$0xff]
    %v627 = vld [vmem:[%s620 + $0x30] sm:$0xff]
    %v628 = vld [vmem:[%s620 + $0x38] sm:$0xff]
    %v629 = vld [vmem:[%s620 + $0x40] sm:$0xff]
    %v630 = vld [vmem:[%s620 + $0x48] sm:$0xff]
    %v631 = vld [vmem:[%s620 + $0x50] sm:$0xff]
    %v632 = vld [vmem:[%s620 + $0x58] sm:$0xff]
    %v633 = vld [vmem:[%s620 + $0x60] sm:$0xff]
    %v634 = vld [vmem:[%s620 + $0x68] sm:$0xff]
    %v635 = vld [vmem:[%s620 + $0x70] sm:$0xff]
    %v636 = vld [vmem:[%s620 + $0x78] sm:$0xff]
    %v637 = vld [vmem:[%s620 + $0x80] sm:$0xff]
    %v638 = vld [vmem:[%s620 + $0x88] sm:$0xff]
    %v639 = vld [vmem:[%s620 + $0x90] sm:$0xff]
    %v640 = vld [vmem:[%s620 + $0x98] sm:$0xff]
    %v641 = vld [vmem:[%s620 + $0xa0] sm:$0xff]
    %v642 = vld [vmem:[%s620 + $0xa8] sm:$0xff]
    %v643 = vld [vmem:[%s620 + $0xb0] sm:$0xff]
    %v644 = vld [vmem:[%s620 + $0xb8] sm:$0xff]
    %v645 = vld [vmem:[%s620 + $0xc0] sm:$0xff]
    %v646 = vld [vmem:[%s620 + $0xc8] sm:$0xff]
    %v647 = vld [vmem:[%s620 + $0xd0] sm:$0xff]
    %v648 = vld [vmem:[%s620 + $0xd8] sm:$0xff]
    %v649 = vld [vmem:[%s620 + $0xe0] sm:$0xff]
    %v650 = vld [vmem:[%s620 + $0xe8] sm:$0xff]
    %v651 = vld [vmem:[%s620 + $0xf0] sm:$0xff]
    %v652 = vld [vmem:[%s620 + $0xf8] sm:$0xff]
    %s653 = scalar_lea.vmem [#allocation13], 4
    %v654 = vld [vmem:[%s653] sm:$0x3]
    %v656 = vperm.slane %v654, 0
    %v657 = vperm.slane %v654, 1
    %660 = vmatpush.msra.mxu0 %v651
    %661 = vmatpush.msra.mxu0 %v649
    %662 = vmatpush.msra.mxu0 %v647
    %663 = vmatpush.msra.mxu0 %v645
    %664 = vmatpush.msra.mxu0 %v643
    %665 = vmatpush.msra.mxu0 %v641
    %666 = vmatpush.msra.mxu0 %v639
    %667 = vmatpush.msra.mxu0 %v637
    %668 = vmatpush.msra.mxu0 %v635
    %669 = vmatpush.msra.mxu0 %v633
    %670 = vmatpush.msra.mxu0 %v631
    %671 = vmatpush.msra.mxu0 %v629
    %672 = vmatpush.msra.mxu0 %v627
    %673 = vmatpush.msra.mxu0 %v625
    %674 = vmatpush.msra.mxu0 %v623
    %675 = vmatpush.msra.mxu0 %v621
    %676 = vmatmul.f32.gmra.mxu0 %v618
    %v677 = vpop.f32.mrf.mxu0
    %v678 = vadd.f32 %v656, %v677
    %679 = vmatmul.f32.gmra.mxu0 %v619
    %v680 = vpop.f32.mrf.mxu0
    %v681 = vadd.f32 %v656, %v680
    %682 = vdwg.mxu0
    %683 = vmatpush.msra.mxu0 %v652
    %684 = vmatpush.msra.mxu0 %v650
    %685 = vmatpush.msra.mxu0 %v648
    %686 = vmatpush.msra.mxu0 %v646
    %687 = vmatpush.msra.mxu0 %v644
    %688 = vmatpush.msra.mxu0 %v642
    %689 = vmatpush.msra.mxu0 %v640
    %690 = vmatpush.msra.mxu0 %v638
    %691 = vmatpush.msra.mxu0 %v636
    %692 = vmatpush.msra.mxu0 %v634
    %693 = vmatpush.msra.mxu0 %v632
    %694 = vmatpush.msra.mxu0 %v630
    %695 = vmatpush.msra.mxu0 %v628
    %696 = vmatpush.msra.mxu0 %v626
    %697 = vmatpush.msra.mxu0 %v624
    %698 = vmatpush.msra.mxu0 %v622
    %699 = vmatmul.f32.gmra.mxu0 %v618
    %v700 = vpop.f32.mrf.mxu0
    %v701 = vadd.f32 %v657, %v700
    %702 = vmatmul.f32.gmra.mxu0 %v619
    %v703 = vpop.f32.mrf.mxu0
    %v704 = vadd.f32 %v657, %v703
    %705 = vdwg.mxu0
    %v706 = vtanh.pop %v678
    %v707 = vtanh.pop %v681
    %v708 = vmul.f32 %v706, 1.442695
    %v709 = vpow.pop %v708
    %v710 = vmul.f32 %v707, 1.442695
    %v711 = vpow.pop %v710
    %v712 = vmul.f32 %v518, %v709
    %v713 = vmul.f32 %v519, %v711
    %v714 = vadd.f32 %v712, %v701
    %v715 = vadd.f32 %v713, %v704
    %716 = vadd.xlane.f32.xlu0 %v706
    %v717 = vpop.xlane.xlu0 %716
    %718 = vadd.xlane.f32.xlu0 %v707
    %v719 = vpop.xlane.xlu0 %718
    %v720 = vadd.f32 %v524, %v717
    %v721 = vadd.f32 %v525, %v719
    %s722 = scalar_lea.vmem [#allocation5], 384
    %v723 = vld [vmem:[%s722] sm:$0xff]
    %v724 = vld [vmem:[%s722 + $0x8] sm:$0xff]
    %v725 = vld [vmem:[%s722 + $0x10] sm:$0xff]
    %v726 = vld [vmem:[%s722 + $0x18] sm:$0xff]
    %v727 = vld [vmem:[%s722 + $0x20] sm:$0xff]
    %v728 = vld [vmem:[%s722 + $0x28] sm:$0xff]
    %v729 = vld [vmem:[%s722 + $0x30] sm:$0xff]
    %v730 = vld [vmem:[%s722 + $0x38] sm:$0xff]
    %v731 = vld [vmem:[%s722 + $0x40] sm:$0xff]
    %v732 = vld [vmem:[%s722 + $0x48] sm:$0xff]
    %v733 = vld [vmem:[%s722 + $0x50] sm:$0xff]
    %v734 = vld [vmem:[%s722 + $0x58] sm:$0xff]
    %v735 = vld [vmem:[%s722 + $0x60] sm:$0xff]
    %v736 = vld [vmem:[%s722 + $0x68] sm:$0xff]
    %v737 = vld [vmem:[%s722 + $0x70] sm:$0xff]
    %v738 = vld [vmem:[%s722 + $0x78] sm:$0xff]
    %s739 = scalar_lea.vmem [#allocation7], 3
    %v740 = vld [vmem:[%s739] sm:$0x1]
    %v742 = vperm.slane %v740, 0
    %744 = vmatpush.msra.mxu0 %v738
    %745 = vmatpush.msra.mxu0 %v737
    %746 = vmatpush.msra.mxu0 %v736
    %747 = vmatpush.msra.mxu0 %v735
    %748 = vmatpush.msra.mxu0 %v734
    %749 = vmatpush.msra.mxu0 %v733
    %750 = vmatpush.msra.mxu0 %v732
    %751 = vmatpush.msra.mxu0 %v731
    %752 = vmatpush.msra.mxu0 %v730
    %753 = vmatpush.msra.mxu0 %v729
    %754 = vmatpush.msra.mxu0 %v728
    %755 = vmatpush.msra.mxu0 %v727
    %756 = vmatpush.msra.mxu0 %v726
    %757 = vmatpush.msra.mxu0 %v725
    %758 = vmatpush.msra.mxu0 %v724
    %759 = vmatpush.msra.mxu0 %v723
    %760 = vmatmul.f32.gmra.mxu0 %v714
    %v761 = vpop.f32.mrf.mxu0
    %v762 = vadd.f32 %v742, %v761
    %763 = vmatmul.f32.gmra.mxu0 %v715
    %v764 = vpop.f32.mrf.mxu0
    %v765 = vadd.f32 %v742, %v764
    %766 = vdwg.mxu0
    %v767 = vmax.f32 %v762, 0.0
    %v768 = vmax.f32 %v765, 0.0
    %s769 = scalar_lea.vmem [#allocation8], 384
    %v770 = vld [vmem:[%s769] sm:$0xff]
    %v771 = vld [vmem:[%s769 + $0x8] sm:$0xff]
    %v772 = vld [vmem:[%s769 + $0x10] sm:$0xff]
    %v773 = vld [vmem:[%s769 + $0x18] sm:$0xff]
    %v774 = vld [vmem:[%s769 + $0x20] sm:$0xff]
    %v775 = vld [vmem:[%s769 + $0x28] sm:$0xff]
    %v776 = vld [vmem:[%s769 + $0x30] sm:$0xff]
    %v777 = vld [vmem:[%s769 + $0x38] sm:$0xff]
    %v778 = vld [vmem:[%s769 + $0x40] sm:$0xff]
    %v779 = vld [vmem:[%s769 + $0x48] sm:$0xff]
    %v780 = vld [vmem:[%s769 + $0x50] sm:$0xff]
    %v781 = vld [vmem:[%s769 + $0x58] sm:$0xff]
    %v782 = vld [vmem:[%s769 + $0x60] sm:$0xff]
    %v783 = vld [vmem:[%s769 + $0x68] sm:$0xff]
    %v784 = vld [vmem:[%s769 + $0x70] sm:$0xff]
    %v785 = vld [vmem:[%s769 + $0x78] sm:$0xff]
    %s786 = scalar_lea.vmem [#allocation10], 3
    %v787 = vld [vmem:[%s786] sm:$0x1]
    %v789 = vperm.slane %v787, 0
    %791 = vmatpush.msra.mxu0 %v785
    %792 = vmatpush.msra.mxu0 %v784
    %793 = vmatpush.msra.mxu0 %v783
    %794 = vmatpush.msra.mxu0 %v782
    %795 = vmatpush.msra.mxu0 %v781
    %796 = vmatpush.msra.mxu0 %v780
    %797 = vmatpush.msra.mxu0 %v779
    %798 = vmatpush.msra.mxu0 %v778
    %799 = vmatpush.msra.mxu0 %v777
    %800 = vmatpush.msra.mxu0 %v776
    %801 = vmatpush.msra.mxu0 %v775
    %802 = vmatpush.msra.mxu0 %v774
    %803 = vmatpush.msra.mxu0 %v773
    %804 = vmatpush.msra.mxu0 %v772
    %805 = vmatpush.msra.mxu0 %v771
    %806 = vmatpush.msra.mxu0 %v770
    %807 = vmatmul.f32.gmra.mxu0 %v767
    %v808 = vpop.f32.mrf.mxu0
    %v809 = vadd.f32 %v789, %v808
    %810 = vmatmul.f32.gmra.mxu0 %v768
    %v811 = vpop.f32.mrf.mxu0
    %v812 = vadd.f32 %v789, %v811
    %813 = vdwg.mxu0
    %v814 = vmax.f32 %v809, 0.0
    %v815 = vmax.f32 %v812, 0.0
    %s816 = scalar_lea.vmem [#allocation11], 768
    %v817 = vld [vmem:[%s816] sm:$0xff]
    %v818 = vld [vmem:[%s816 + $0x8] sm:$0xff]
    %v819 = vld [vmem:[%s816 + $0x10] sm:$0xff]
    %v820 = vld [vmem:[%s816 + $0x18] sm:$0xff]
    %v821 = vld [vmem:[%s816 + $0x20] sm:$0xff]
    %v822 = vld [vmem:[%s816 + $0x28] sm:$0xff]
    %v823 = vld [vmem:[%s816 + $0x30] sm:$0xff]
    %v824 = vld [vmem:[%s816 + $0x38] sm:$0xff]
    %v825 = vld [vmem:[%s816 + $0x40] sm:$0xff]
    %v826 = vld [vmem:[%s816 + $0x48] sm:$0xff]
    %v827 = vld [vmem:[%s816 + $0x50] sm:$0xff]
    %v828 = vld [vmem:[%s816 + $0x58] sm:$0xff]
    %v829 = vld [vmem:[%s816 + $0x60] sm:$0xff]
    %v830 = vld [vmem:[%s816 + $0x68] sm:$0xff]
    %v831 = vld [vmem:[%s816 + $0x70] sm:$0xff]
    %v832 = vld [vmem:[%s816 + $0x78] sm:$0xff]
    %v833 = vld [vmem:[%s816 + $0x80] sm:$0xff]
    %v834 = vld [vmem:[%s816 + $0x88] sm:$0xff]
    %v835 = vld [vmem:[%s816 + $0x90] sm:$0xff]
    %v836 = vld [vmem:[%s816 + $0x98] sm:$0xff]
    %v837 = vld [vmem:[%s816 + $0xa0] sm:$0xff]
    %v838 = vld [vmem:[%s816 + $0xa8] sm:$0xff]
    %v839 = vld [vmem:[%s816 + $0xb0] sm:$0xff]
    %v840 = vld [vmem:[%s816 + $0xb8] sm:$0xff]
    %v841 = vld [vmem:[%s816 + $0xc0] sm:$0xff]
    %v842 = vld [vmem:[%s816 + $0xc8] sm:$0xff]
    %v843 = vld [vmem:[%s816 + $0xd0] sm:$0xff]
    %v844 = vld [vmem:[%s816 + $0xd8] sm:$0xff]
    %v845 = vld [vmem:[%s816 + $0xe0] sm:$0xff]
    %v846 = vld [vmem:[%s816 + $0xe8] sm:$0xff]
    %v847 = vld [vmem:[%s816 + $0xf0] sm:$0xff]
    %v848 = vld [vmem:[%s816 + $0xf8] sm:$0xff]
    %s849 = scalar_lea.vmem [#allocation13], 6
    %v850 = vld [vmem:[%s849] sm:$0x3]
    %v852 = vperm.slane %v850, 0
    %v853 = vperm.slane %v850, 1
    %856 = vmatpush.msra.mxu0 %v847
    %857 = vmatpush.msra.mxu0 %v845
    %858 = vmatpush.msra.mxu0 %v843
    %859 = vmatpush.msra.mxu0 %v841
    %860 = vmatpush.msra.mxu0 %v839
    %861 = vmatpush.msra.mxu0 %v837
    %862 = vmatpush.msra.mxu0 %v835
    %863 = vmatpush.msra.mxu0 %v833
    %864 = vmatpush.msra.mxu0 %v831
    %865 = vmatpush.msra.mxu0 %v829
    %866 = vmatpush.msra.mxu0 %v827
    %867 = vmatpush.msra.mxu0 %v825
    %868 = vmatpush.msra.mxu0 %v823
    %869 = vmatpush.msra.mxu0 %v821
    %870 = vmatpush.msra.mxu0 %v819
    %871 = vmatpush.msra.mxu0 %v817
    %872 = vmatmul.f32.gmra.mxu0 %v814
    %v873 = vpop.f32.mrf.mxu0
    %v874 = vadd.f32 %v852, %v873
    %875 = vmatmul.f32.gmra.mxu0 %v815
    %v876 = vpop.f32.mrf.mxu0
    %v877 = vadd.f32 %v852, %v876
    %878 = vdwg.mxu0
    %879 = vmatpush.msra.mxu0 %v848
    %880 = vmatpush.msra.mxu0 %v846
    %881 = vmatpush.msra.mxu0 %v844
    %882 = vmatpush.msra.mxu0 %v842
    %883 = vmatpush.msra.mxu0 %v840
    %884 = vmatpush.msra.mxu0 %v838
    %885 = vmatpush.msra.mxu0 %v836
    %886 = vmatpush.msra.mxu0 %v834
    %887 = vmatpush.msra.mxu0 %v832
    %888 = vmatpush.msra.mxu0 %v830
    %889 = vmatpush.msra.mxu0 %v828
    %890 = vmatpush.msra.mxu0 %v826
    %891 = vmatpush.msra.mxu0 %v824
    %892 = vmatpush.msra.mxu0 %v822
    %893 = vmatpush.msra.mxu0 %v820
    %894 = vmatpush.msra.mxu0 %v818
    %895 = vmatmul.f32.gmra.mxu0 %v814
    %v896 = vpop.f32.mrf.mxu0
    %v897 = vadd.f32 %v853, %v896
    %898 = vmatmul.f32.gmra.mxu0 %v815
    %v899 = vpop.f32.mrf.mxu0
    %v900 = vadd.f32 %v853, %v899
    %901 = vdwg.mxu0
    %v902 = vtanh.pop %v874
    %v903 = vtanh.pop %v877
    %v904 = vmul.f32 %v902, 1.442695
    %v905 = vpow.pop %v904
    %v906 = vmul.f32 %v903, 1.442695
    %v907 = vpow.pop %v906
    %v908 = vmul.f32 %v714, %v905
    %v909 = vmul.f32 %v715, %v907
    %v910 = vadd.f32 %v908, %v897
    %v911 = vadd.f32 %v909, %v900
    %912 = vadd.xlane.f32.xlu0 %v902
    %v913 = vpop.xlane.xlu0 %912
    %914 = vadd.xlane.f32.xlu0 %v903
    %v915 = vpop.xlane.xlu0 %914
    %v916 = vadd.f32 %v720, %v913
    %v917 = vadd.f32 %v721, %v915
    %s918 = scalar_lea.vmem [#allocation5], 512
    %v919 = vld [vmem:[%s918] sm:$0xff]
    %v920 = vld [vmem:[%s918 + $0x8] sm:$0xff]
    %v921 = vld [vmem:[%s918 + $0x10] sm:$0xff]
    %v922 = vld [vmem:[%s918 + $0x18] sm:$0xff]
    %v923 = vld [vmem:[%s918 + $0x20] sm:$0xff]
    %v924 = vld [vmem:[%s918 + $0x28] sm:$0xff]
    %v925 = vld [vmem:[%s918 + $0x30] sm:$0xff]
    %v926 = vld [vmem:[%s918 + $0x38] sm:$0xff]
    %v927 = vld [vmem:[%s918 + $0x40] sm:$0xff]
    %v928 = vld [vmem:[%s918 + $0x48] sm:$0xff]
    %v929 = vld [vmem:[%s918 + $0x50] sm:$0xff]
    %v930 = vld [vmem:[%s918 + $0x58] sm:$0xff]
    %v931 = vld [vmem:[%s918 + $0x60] sm:$0xff]
    %v932 = vld [vmem:[%s918 + $0x68] sm:$0xff]
    %v933 = vld [vmem:[%s918 + $0x70] sm:$0xff]
    %v934 = vld [vmem:[%s918 + $0x78] sm:$0xff]
    %s935 = scalar_lea.vmem [#allocation7], 4
    %v936 = vld [vmem:[%s935] sm:$0x1]
    %v938 = vperm.slane %v936, 0
    %940 = vmatpush.msra.mxu0 %v934
    %941 = vmatpush.msra.mxu0 %v933
    %942 = vmatpush.msra.mxu0 %v932
    %943 = vmatpush.msra.mxu0 %v931
    %944 = vmatpush.msra.mxu0 %v930
    %945 = vmatpush.msra.mxu0 %v929
    %946 = vmatpush.msra.mxu0 %v928
    %947 = vmatpush.msra.mxu0 %v927
    %948 = vmatpush.msra.mxu0 %v926
    %949 = vmatpush.msra.mxu0 %v925
    %950 = vmatpush.msra.mxu0 %v924
    %951 = vmatpush.msra.mxu0 %v923
    %952 = vmatpush.msra.mxu0 %v922
    %953 = vmatpush.msra.mxu0 %v921
    %954 = vmatpush.msra.mxu0 %v920
    %955 = vmatpush.msra.mxu0 %v919
    %956 = vmatmul.f32.gmra.mxu0 %v910
    %v957 = vpop.f32.mrf.mxu0
    %v958 = vadd.f32 %v938, %v957
    %959 = vmatmul.f32.gmra.mxu0 %v911
    %v960 = vpop.f32.mrf.mxu0
    %v961 = vadd.f32 %v938, %v960
    %962 = vdwg.mxu0
    %v963 = vmax.f32 %v958, 0.0
    %v964 = vmax.f32 %v961, 0.0
    %s965 = scalar_lea.vmem [#allocation8], 512
    %v966 = vld [vmem:[%s965] sm:$0xff]
    %v967 = vld [vmem:[%s965 + $0x8] sm:$0xff]
    %v968 = vld [vmem:[%s965 + $0x10] sm:$0xff]
    %v969 = vld [vmem:[%s965 + $0x18] sm:$0xff]
    %v970 = vld [vmem:[%s965 + $0x20] sm:$0xff]
    %v971 = vld [vmem:[%s965 + $0x28] sm:$0xff]
    %v972 = vld [vmem:[%s965 + $0x30] sm:$0xff]
    %v973 = vld [vmem:[%s965 + $0x38] sm:$0xff]
    %v974 = vld [vmem:[%s965 + $0x40] sm:$0xff]
    %v975 = vld [vmem:[%s965 + $0x48] sm:$0xff]
    %v976 = vld [vmem:[%s965 + $0x50] sm:$0xff]
    %v977 = vld [vmem:[%s965 + $0x58] sm:$0xff]
    %v978 = vld [vmem:[%s965 + $0x60] sm:$0xff]
    %v979 = vld [vmem:[%s965 + $0x68] sm:$0xff]
    %v980 = vld [vmem:[%s965 + $0x70] sm:$0xff]
    %v981 = vld [vmem:[%s965 + $0x78] sm:$0xff]
    %s982 = scalar_lea.vmem [#allocation10], 4
    %v983 = vld [vmem:[%s982] sm:$0x1]
    %v985 = vperm.slane %v983, 0
    %987 = vmatpush.msra.mxu0 %v981
    %988 = vmatpush.msra.mxu0 %v980
    %989 = vmatpush.msra.mxu0 %v979
    %990 = vmatpush.msra.mxu0 %v978
    %991 = vmatpush.msra.mxu0 %v977
    %992 = vmatpush.msra.mxu0 %v976
    %993 = vmatpush.msra.mxu0 %v975
    %994 = vmatpush.msra.mxu0 %v974
    %995 = vmatpush.msra.mxu0 %v973
    %996 = vmatpush.msra.mxu0 %v972
    %997 = vmatpush.msra.mxu0 %v971
    %998 = vmatpush.msra.mxu0 %v970
    %999 = vmatpush.msra.mxu0 %v969
    %1000 = vmatpush.msra.mxu0 %v968
    %1001 = vmatpush.msra.mxu0 %v967
    %1002 = vmatpush.msra.mxu0 %v966
    %1003 = vmatmul.f32.gmra.mxu0 %v963
    %v1004 = vpop.f32.mrf.mxu0
    %v1005 = vadd.f32 %v985, %v1004
    %1006 = vmatmul.f32.gmra.mxu0 %v964
    %v1007 = vpop.f32.mrf.mxu0
    %v1008 = vadd.f32 %v985, %v1007
    %1009 = vdwg.mxu0
    %v1010 = vmax.f32 %v1005, 0.0
    %v1011 = vmax.f32 %v1008, 0.0
    %s1012 = scalar_lea.vmem [#allocation11], 1024
    %v1013 = vld [vmem:[%s1012] sm:$0xff]
    %v1014 = vld [vmem:[%s1012 + $0x8] sm:$0xff]
    %v1015 = vld [vmem:[%s1012 + $0x10] sm:$0xff]
    %v1016 = vld [vmem:[%s1012 + $0x18] sm:$0xff]
    %v1017 = vld [vmem:[%s1012 + $0x20] sm:$0xff]
    %v1018 = vld [vmem:[%s1012 + $0x28] sm:$0xff]
    %v1019 = vld [vmem:[%s1012 + $0x30] sm:$0xff]
    %v1020 = vld [vmem:[%s1012 + $0x38] sm:$0xff]
    %v1021 = vld [vmem:[%s1012 + $0x40] sm:$0xff]
    %v1022 = vld [vmem:[%s1012 + $0x48] sm:$0xff]
    %v1023 = vld [vmem:[%s1012 + $0x50] sm:$0xff]
    %v1024 = vld [vmem:[%s1012 + $0x58] sm:$0xff]
    %v1025 = vld [vmem:[%s1012 + $0x60] sm:$0xff]
    %v1026 = vld [vmem:[%s1012 + $0x68] sm:$0xff]
    %v1027 = vld [vmem:[%s1012 + $0x70] sm:$0xff]
    %v1028 = vld [vmem:[%s1012 + $0x78] sm:$0xff]
    %v1029 = vld [vmem:[%s1012 + $0x80] sm:$0xff]
    %v1030 = vld [vmem:[%s1012 + $0x88] sm:$0xff]
    %v1031 = vld [vmem:[%s1012 + $0x90] sm:$0xff]
    %v1032 = vld [vmem:[%s1012 + $0x98] sm:$0xff]
    %v1033 = vld [vmem:[%s1012 + $0xa0] sm:$0xff]
    %v1034 = vld [vmem:[%s1012 + $0xa8] sm:$0xff]
    %v1035 = vld [vmem:[%s1012 + $0xb0] sm:$0xff]
    %v1036 = vld [vmem:[%s1012 + $0xb8] sm:$0xff]
    %v1037 = vld [vmem:[%s1012 + $0xc0] sm:$0xff]
    %v1038 = vld [vmem:[%s1012 + $0xc8] sm:$0xff]
    %v1039 = vld [vmem:[%s1012 + $0xd0] sm:$0xff]
    %v1040 = vld [vmem:[%s1012 + $0xd8] sm:$0xff]
    %v1041 = vld [vmem:[%s1012 + $0xe0] sm:$0xff]
    %v1042 = vld [vmem:[%s1012 + $0xe8] sm:$0xff]
    %v1043 = vld [vmem:[%s1012 + $0xf0] sm:$0xff]
    %v1044 = vld [vmem:[%s1012 + $0xf8] sm:$0xff]
    %s1045 = scalar_lea.vmem [#allocation13], 8
    %v1046 = vld [vmem:[%s1045] sm:$0x3]
    %v1048 = vperm.slane %v1046, 0
    %v1049 = vperm.slane %v1046, 1
    %1052 = vmatpush.msra.mxu0 %v1043
    %1053 = vmatpush.msra.mxu0 %v1041
    %1054 = vmatpush.msra.mxu0 %v1039
    %1055 = vmatpush.msra.mxu0 %v1037
    %1056 = vmatpush.msra.mxu0 %v1035
    %1057 = vmatpush.msra.mxu0 %v1033
    %1058 = vmatpush.msra.mxu0 %v1031
    %1059 = vmatpush.msra.mxu0 %v1029
    %1060 = vmatpush.msra.mxu0 %v1027
    %1061 = vmatpush.msra.mxu0 %v1025
    %1062 = vmatpush.msra.mxu0 %v1023
    %1063 = vmatpush.msra.mxu0 %v1021
    %1064 = vmatpush.msra.mxu0 %v1019
    %1065 = vmatpush.msra.mxu0 %v1017
    %1066 = vmatpush.msra.mxu0 %v1015
    %1067 = vmatpush.msra.mxu0 %v1013
    %1068 = vmatmul.f32.gmra.mxu0 %v1010
    %v1069 = vpop.f32.mrf.mxu0
    %v1070 = vadd.f32 %v1048, %v1069
    %1071 = vmatmul.f32.gmra.mxu0 %v1011
    %v1072 = vpop.f32.mrf.mxu0
    %v1073 = vadd.f32 %v1048, %v1072
    %1074 = vdwg.mxu0
    %1075 = vmatpush.msra.mxu0 %v1044
    %1076 = vmatpush.msra.mxu0 %v1042
    %1077 = vmatpush.msra.mxu0 %v1040
    %1078 = vmatpush.msra.mxu0 %v1038
    %1079 = vmatpush.msra.mxu0 %v1036
    %1080 = vmatpush.msra.mxu0 %v1034
    %1081 = vmatpush.msra.mxu0 %v1032
    %1082 = vmatpush.msra.mxu0 %v1030
    %1083 = vmatpush.msra.mxu0 %v1028
    %1084 = vmatpush.msra.mxu0 %v1026
    %1085 = vmatpush.msra.mxu0 %v1024
    %1086 = vmatpush.msra.mxu0 %v1022
    %1087 = vmatpush.msra.mxu0 %v1020
    %1088 = vmatpush.msra.mxu0 %v1018
    %1089 = vmatpush.msra.mxu0 %v1016
    %1090 = vmatpush.msra.mxu0 %v1014
    %1091 = vmatmul.f32.gmra.mxu0 %v1010
    %v1092 = vpop.f32.mrf.mxu0
    %v1093 = vadd.f32 %v1049, %v1092
    %1094 = vmatmul.f32.gmra.mxu0 %v1011
    %v1095 = vpop.f32.mrf.mxu0
    %v1096 = vadd.f32 %v1049, %v1095
    %1097 = vdwg.mxu0
    %v1098 = vtanh.pop %v1070
    %v1099 = vtanh.pop %v1073
    %v1100 = vmul.f32 %v1098, 1.442695
    %v1101 = vpow.pop %v1100
    %v1102 = vmul.f32 %v1099, 1.442695
    %v1103 = vpow.pop %v1102
    %v1104 = vmul.f32 %v910, %v1101
    %v1105 = vmul.f32 %v911, %v1103
    %v1106 = vadd.f32 %v1104, %v1093
    %v1107 = vadd.f32 %v1105, %v1096
    %1108 = vadd.xlane.f32.xlu0 %v1098
    %v1109 = vpop.xlane.xlu0 %1108
    %1110 = vadd.xlane.f32.xlu0 %v1099
    %v1111 = vpop.xlane.xlu0 %1110
    %v1112 = vadd.f32 %v916, %v1109
    %v1113 = vadd.f32 %v917, %v1111
    %s1114 = scalar_lea.vmem [#allocation5], 640
    %v1115 = vld [vmem:[%s1114] sm:$0xff]
    %v1116 = vld [vmem:[%s1114 + $0x8] sm:$0xff]
    %v1117 = vld [vmem:[%s1114 + $0x10] sm:$0xff]
    %v1118 = vld [vmem:[%s1114 + $0x18] sm:$0xff]
    %v1119 = vld [vmem:[%s1114 + $0x20] sm:$0xff]
    %v1120 = vld [vmem:[%s1114 + $0x28] sm:$0xff]
    %v1121 = vld [vmem:[%s1114 + $0x30] sm:$0xff]
    %v1122 = vld [vmem:[%s1114 + $0x38] sm:$0xff]
    %v1123 = vld [vmem:[%s1114 + $0x40] sm:$0xff]
    %v1124 = vld [vmem:[%s1114 + $0x48] sm:$0xff]
    %v1125 = vld [vmem:[%s1114 + $0x50] sm:$0xff]
    %v1126 = vld [vmem:[%s1114 + $0x58] sm:$0xff]
    %v1127 = vld [vmem:[%s1114 + $0x60] sm:$0xff]
    %v1128 = vld [vmem:[%s1114 + $0x68] sm:$0xff]
    %v1129 = vld [vmem:[%s1114 + $0x70] sm:$0xff]
    %v1130 = vld [vmem:[%s1114 + $0x78] sm:$0xff]
    %s1131 = scalar_lea.vmem [#allocation7], 5
    %v1132 = vld [vmem:[%s1131] sm:$0x1]
    %v1134 = vperm.slane %v1132, 0
    %1136 = vmatpush.msra.mxu0 %v1130
    %1137 = vmatpush.msra.mxu0 %v1129
    %1138 = vmatpush.msra.mxu0 %v1128
    %1139 = vmatpush.msra.mxu0 %v1127
    %1140 = vmatpush.msra.mxu0 %v1126
    %1141 = vmatpush.msra.mxu0 %v1125
    %1142 = vmatpush.msra.mxu0 %v1124
    %1143 = vmatpush.msra.mxu0 %v1123
    %1144 = vmatpush.msra.mxu0 %v1122
    %1145 = vmatpush.msra.mxu0 %v1121
    %1146 = vmatpush.msra.mxu0 %v1120
    %1147 = vmatpush.msra.mxu0 %v1119
    %1148 = vmatpush.msra.mxu0 %v1118
    %1149 = vmatpush.msra.mxu0 %v1117
    %1150 = vmatpush.msra.mxu0 %v1116
    %1151 = vmatpush.msra.mxu0 %v1115
    %1152 = vmatmul.f32.gmra.mxu0 %v1106
    %v1153 = vpop.f32.mrf.mxu0
    %v1154 = vadd.f32 %v1134, %v1153
    %1155 = vmatmul.f32.gmra.mxu0 %v1107
    %v1156 = vpop.f32.mrf.mxu0
    %v1157 = vadd.f32 %v1134, %v1156
    %1158 = vdwg.mxu0
    %v1159 = vmax.f32 %v1154, 0.0
    %v1160 = vmax.f32 %v1157, 0.0
    %s1161 = scalar_lea.vmem [#allocation8], 640
    %v1162 = vld [vmem:[%s1161] sm:$0xff]
    %v1163 = vld [vmem:[%s1161 + $0x8] sm:$0xff]
    %v1164 = vld [vmem:[%s1161 + $0x10] sm:$0xff]
    %v1165 = vld [vmem:[%s1161 + $0x18] sm:$0xff]
    %v1166 = vld [vmem:[%s1161 + $0x20] sm:$0xff]
    %v1167 = vld [vmem:[%s1161 + $0x28] sm:$0xff]
    %v1168 = vld [vmem:[%s1161 + $0x30] sm:$0xff]
    %v1169 = vld [vmem:[%s1161 + $0x38] sm:$0xff]
    %v1170 = vld [vmem:[%s1161 + $0x40] sm:$0xff]
    %v1171 = vld [vmem:[%s1161 + $0x48] sm:$0xff]
    %v1172 = vld [vmem:[%s1161 + $0x50] sm:$0xff]
    %v1173 = vld [vmem:[%s1161 + $0x58] sm:$0xff]
    %v1174 = vld [vmem:[%s1161 + $0x60] sm:$0xff]
    %v1175 = vld [vmem:[%s1161 + $0x68] sm:$0xff]
    %v1176 = vld [vmem:[%s1161 + $0x70] sm:$0xff]
    %v1177 = vld [vmem:[%s1161 + $0x78] sm:$0xff]
    %s1178 = scalar_lea.vmem [#allocation10], 5
    %v1179 = vld [vmem:[%s1178] sm:$0x1]
    %v1181 = vperm.slane %v1179, 0
    %1183 = vmatpush.msra.mxu0 %v1177
    %1184 = vmatpush.msra.mxu0 %v1176
    %1185 = vmatpush.msra.mxu0 %v1175
    %1186 = vmatpush.msra.mxu0 %v1174
    %1187 = vmatpush.msra.mxu0 %v1173
    %1188 = vmatpush.msra.mxu0 %v1172
    %1189 = vmatpush.msra.mxu0 %v1171
    %1190 = vmatpush.msra.mxu0 %v1170
    %1191 = vmatpush.msra.mxu0 %v1169
    %1192 = vmatpush.msra.mxu0 %v1168
    %1193 = vmatpush.msra.mxu0 %v1167
    %1194 = vmatpush.msra.mxu0 %v1166
    %1195 = vmatpush.msra.mxu0 %v1165
    %1196 = vmatpush.msra.mxu0 %v1164
    %1197 = vmatpush.msra.mxu0 %v1163
    %1198 = vmatpush.msra.mxu0 %v1162
    %1199 = vmatmul.f32.gmra.mxu0 %v1159
    %v1200 = vpop.f32.mrf.mxu0
    %v1201 = vadd.f32 %v1181, %v1200
    %1202 = vmatmul.f32.gmra.mxu0 %v1160
    %v1203 = vpop.f32.mrf.mxu0
    %v1204 = vadd.f32 %v1181, %v1203
    %1205 = vdwg.mxu0
    %v1206 = vmax.f32 %v1201, 0.0
    %v1207 = vmax.f32 %v1204, 0.0
    %s1208 = scalar_lea.vmem [#allocation11], 1280
    %v1209 = vld [vmem:[%s1208] sm:$0xff]
    %v1210 = vld [vmem:[%s1208 + $0x8] sm:$0xff]
    %v1211 = vld [vmem:[%s1208 + $0x10] sm:$0xff]
    %v1212 = vld [vmem:[%s1208 + $0x18] sm:$0xff]
    %v1213 = vld [vmem:[%s1208 + $0x20] sm:$0xff]
    %v1214 = vld [vmem:[%s1208 + $0x28] sm:$0xff]
    %v1215 = vld [vmem:[%s1208 + $0x30] sm:$0xff]
    %v1216 = vld [vmem:[%s1208 + $0x38] sm:$0xff]
    %v1217 = vld [vmem:[%s1208 + $0x40] sm:$0xff]
    %v1218 = vld [vmem:[%s1208 + $0x48] sm:$0xff]
    %v1219 = vld [vmem:[%s1208 + $0x50] sm:$0xff]
    %v1220 = vld [vmem:[%s1208 + $0x58] sm:$0xff]
    %v1221 = vld [vmem:[%s1208 + $0x60] sm:$0xff]
    %v1222 = vld [vmem:[%s1208 + $0x68] sm:$0xff]
    %v1223 = vld [vmem:[%s1208 + $0x70] sm:$0xff]
    %v1224 = vld [vmem:[%s1208 + $0x78] sm:$0xff]
    %v1225 = vld [vmem:[%s1208 + $0x80] sm:$0xff]
    %v1226 = vld [vmem:[%s1208 + $0x88] sm:$0xff]
    %v1227 = vld [vmem:[%s1208 + $0x90] sm:$0xff]
    %v1228 = vld [vmem:[%s1208 + $0x98] sm:$0xff]
    %v1229 = vld [vmem:[%s1208 + $0xa0] sm:$0xff]
    %v1230 = vld [vmem:[%s1208 + $0xa8] sm:$0xff]
    %v1231 = vld [vmem:[%s1208 + $0xb0] sm:$0xff]
    %v1232 = vld [vmem:[%s1208 + $0xb8] sm:$0xff]
    %v1233 = vld [vmem:[%s1208 + $0xc0] sm:$0xff]
    %v1234 = vld [vmem:[%s1208 + $0xc8] sm:$0xff]
    %v1235 = vld [vmem:[%s1208 + $0xd0] sm:$0xff]
    %v1236 = vld [vmem:[%s1208 + $0xd8] sm:$0xff]
    %v1237 = vld [vmem:[%s1208 + $0xe0] sm:$0xff]
    %v1238 = vld [vmem:[%s1208 + $0xe8] sm:$0xff]
    %v1239 = vld [vmem:[%s1208 + $0xf0] sm:$0xff]
    %v1240 = vld [vmem:[%s1208 + $0xf8] sm:$0xff]
    %s1241 = scalar_lea.vmem [#allocation13], 10
    %v1242 = vld [vmem:[%s1241] sm:$0x3]
    %v1244 = vperm.slane %v1242, 0
    %v1245 = vperm.slane %v1242, 1
    %1248 = vmatpush.msra.mxu0 %v1239
    %1249 = vmatpush.msra.mxu0 %v1237
    %1250 = vmatpush.msra.mxu0 %v1235
    %1251 = vmatpush.msra.mxu0 %v1233
    %1252 = vmatpush.msra.mxu0 %v1231
    %1253 = vmatpush.msra.mxu0 %v1229
    %1254 = vmatpush.msra.mxu0 %v1227
    %1255 = vmatpush.msra.mxu0 %v1225
    %1256 = vmatpush.msra.mxu0 %v1223
    %1257 = vmatpush.msra.mxu0 %v1221
    %1258 = vmatpush.msra.mxu0 %v1219
    %1259 = vmatpush.msra.mxu0 %v1217
    %1260 = vmatpush.msra.mxu0 %v1215
    %1261 = vmatpush.msra.mxu0 %v1213
    %1262 = vmatpush.msra.mxu0 %v1211
    %1263 = vmatpush.msra.mxu0 %v1209
    %1264 = vmatmul.f32.gmra.mxu0 %v1206
    %v1265 = vpop.f32.mrf.mxu0
    %v1266 = vadd.f32 %v1244, %v1265
    %1267 = vmatmul.f32.gmra.mxu0 %v1207
    %v1268 = vpop.f32.mrf.mxu0
    %v1269 = vadd.f32 %v1244, %v1268
    %1270 = vdwg.mxu0
    %1271 = vmatpush.msra.mxu0 %v1240
    %1272 = vmatpush.msra.mxu0 %v1238
    %1273 = vmatpush.msra.mxu0 %v1236
    %1274 = vmatpush.msra.mxu0 %v1234
    %1275 = vmatpush.msra.mxu0 %v1232
    %1276 = vmatpush.msra.mxu0 %v1230
    %1277 = vmatpush.msra.mxu0 %v1228
    %1278 = vmatpush.msra.mxu0 %v1226
    %1279 = vmatpush.msra.mxu0 %v1224
    %1280 = vmatpush.msra.mxu0 %v1222
    %1281 = vmatpush.msra.mxu0 %v1220
    %1282 = vmatpush.msra.mxu0 %v1218
    %1283 = vmatpush.msra.mxu0 %v1216
    %1284 = vmatpush.msra.mxu0 %v1214
    %1285 = vmatpush.msra.mxu0 %v1212
    %1286 = vmatpush.msra.mxu0 %v1210
    %1287 = vmatmul.f32.gmra.mxu0 %v1206
    %v1288 = vpop.f32.mrf.mxu0
    %v1289 = vadd.f32 %v1245, %v1288
    %1290 = vmatmul.f32.gmra.mxu0 %v1207
    %v1291 = vpop.f32.mrf.mxu0
    %v1292 = vadd.f32 %v1245, %v1291
    %1293 = vdwg.mxu0
    %v1294 = vtanh.pop %v1266
    %v1295 = vtanh.pop %v1269
    %v1296 = vmul.f32 %v1294, 1.442695
    %v1297 = vpow.pop %v1296
    %v1298 = vmul.f32 %v1295, 1.442695
    %v1299 = vpow.pop %v1298
    %v1300 = vmul.f32 %v1106, %v1297
    %v1301 = vmul.f32 %v1107, %v1299
    %v1302 = vadd.f32 %v1300, %v1289
    %v1303 = vadd.f32 %v1301, %v1292
    %1304 = vadd.xlane.f32.xlu0 %v1294
    %v1305 = vpop.xlane.xlu0 %1304
    %1306 = vadd.xlane.f32.xlu0 %v1295
    %v1307 = vpop.xlane.xlu0 %1306
    %v1308 = vadd.f32 %v1112, %v1305
    %v1309 = vadd.f32 %v1113, %v1307
    %1310 = vst [vmem:[#allocation14] sm:$0xff] %v1302
    %1311 = vst [vmem:[#allocation14 + $0x8] sm:$0xff] %v1303
    %vm1312 = vcmask 64512
    %1313 = vst.msk [vmem:[%s8] sm:$0xff] %vm1312, %v1308
    %1314 = vst.msk [vmem:[%s8 + $0x8] sm:$0xff] %vm1312, %v1309
    // Predicated region
    $region58: #{tpu_custom_call.1} parent=1 // pred_check
      _
    $region59: #{tpu_custom_call.1} parent=1 // pred_check_branch
      %1316 = sbr.rel (0) target = $region61
    $region60: #{tpu_custom_call.1} parent=1 // pred_region
      %1318 = vsyncadd [#allocation4], 0
      %s1319 = sshll.u32 [#allocation14], 4
      %s1320 = int_to_ptr.vmem [resolvable:$true] %s1319
      %s1321 = sshll.u32 %s7, 4
      %s1322 = int_to_ptr.hbm [resolvable:$true] %s1321
      %1327 = dma.vmem_to_hbm [thread:$0]  %s1320, 256, %s1322, [#allocation4], 128, 128, 8
    $region61: #{tpu_custom_call.1} parent=1 // pred_fallthru
      _
    // Predicated region
    $region62: #{tpu_custom_call.1} parent=1 // pred_check
      _
    $region63: #{tpu_custom_call.1} parent=1 // pred_check_branch
      %1329 = sbr.rel (0) target = $region65
    $region64: #{tpu_custom_call.1} parent=1 // pred_region
      _
    $region65: #{tpu_custom_call.1} parent=1 // pred_fallthru
      _
    // Predicated region
    $region66: #{tpu_custom_call.1} parent=1 // pred_check
      _
    $region67: #{tpu_custom_call.1} parent=1 // pred_check_branch
      %1331 = sbr.rel (0) target = $region69
    $region68: #{tpu_custom_call.1} parent=1 // pred_region
      %1333 = dma.done [#allocation4], 256
    $region69: #{tpu_custom_call.1} parent=1 // pred_fallthru
      _
    // Predicated region
    $region70: #{tpu_custom_call.1} parent=1 // pred_check
      _
    $region71: #{tpu_custom_call.1} parent=1 // pred_check_branch
      %1335 = sbr.rel (0) target = $region73
    $region72: #{tpu_custom_call.1} parent=1 // pred_region
      _
    $region73: #{tpu_custom_call.1} parent=1 // pred_fallthru
      _
    %1336 = vsyncpa [#allocation3], 1
    %1337 = vsyncpa [#allocation6], 1
    %1338 = vsyncpa [#allocation9], 1
    %1339 = vsyncpa [#allocation12], 1
    %1340 = vsyncpa [#allocation4], 1

</llo_original>
